<compile_context>
chip_gen: v7x
topology: tpu7x:2x2x1
jax: 0.10.0
libtpu: 0.0.40
codegen_flags: <defaults>
</compile_context>

<pallas_src>
import functools

import jax
import jax.numpy as jnp
from jax.experimental import pallas as pl
from jax.experimental.pallas import tpu as pltpu

# Large-but-finite mask value (finite so exp() underflows to 0 instead of
# producing inf - inf NaNs in the online-softmax recurrence).
_MASK_VALUE = -0.7 * float(jnp.finfo(jnp.float32).max)


def _sdpa_kernel(*refs, scale, causal, has_mask, t_valid, t_total, tq, tk):
    # in: q (1,tq,C), k/v (1,tk,C), [mask (tq,tk) int8]   out: o (1,tq,C)
    # scratch: m (tq,1), l (tq,1), acc (tq,C)  all f32
    if has_mask:
        q_ref, k_ref, v_ref, mask_ref, o_ref, m_sc, l_sc, acc_sc = refs
    else:
        q_ref, k_ref, v_ref, o_ref, m_sc, l_sc, acc_sc = refs
        mask_ref = None

    qi = pl.program_id(1)
    ki = pl.program_id(2)

    @pl.when(ki == 0)
    def _():
        m_sc[...] = jnp.full_like(m_sc, _MASK_VALUE)
        l_sc[...] = jnp.zeros_like(l_sc)
        acc_sc[...] = jnp.zeros_like(acc_sc)

    def compute():
        # NT contraction (tq,C)x(tk,C)->(tq,tk): MXU consumes this directly,
        # no explicit transpose / relayout of the K tile.
        s = jax.lax.dot_general(
            q_ref[0], k_ref[0], (((1,), (1,)), ((), ())),
            preferred_element_type=jnp.float32)
        s = s * scale  # scale the f32 logits once (hoisted off Q)

        conds = []
        if has_mask:
            conds.append(mask_ref[...] != 0)
        if causal:
            rows = qi * tq + jax.lax.broadcasted_iota(jnp.int32, (tq, tk), 0)
            cols = ki * tk + jax.lax.broadcasted_iota(jnp.int32, (tq, tk), 1)
            conds.append(cols <= rows)
        if (t_valid != t_total) and (not has_mask) and (not causal):
            # Key-padding mask for the padded tail (only needed when no other
            # mask already covers it).
            cols = ki * tk + jax.lax.broadcasted_iota(jnp.int32, (tq, tk), 1)
            conds.append(cols < t_valid)
        for c in conds:
            s = jnp.where(c, s, _MASK_VALUE)

        m_prev = m_sc[...]                                  # (tq, 1)
        m_new = jnp.maximum(m_prev, jnp.max(s, axis=-1, keepdims=True))
        alpha = jnp.exp(m_prev - m_new)                     # EUP
        p = jnp.exp(s - m_new)                              # (tq, tk)
        l_sc[...] = alpha * l_sc[...] + jnp.sum(p, axis=-1, keepdims=True)
        acc_sc[...] = alpha * acc_sc[...] + jnp.dot(
            p.astype(v_ref.dtype), v_ref[0], preferred_element_type=jnp.float32)
        m_sc[...] = m_new

    if causal:
        # Skip KV blocks entirely above the diagonal (~2x fewer MXU/EUP ops).
        @pl.when(ki * tk < (qi + 1) * tq)
        def _():
            compute()
    else:
        compute()

    @pl.when(ki == pl.num_programs(2) - 1)
    def _():
        o_ref[0] = (acc_sc[...] *
                    pl.reciprocal(l_sc[...], approx=False)).astype(o_ref.dtype)


def _pick_tiles(t_padded):
    """Per-generation MXU-shaped tiles (t_padded is a multiple of 128)."""
    kind = ""
    try:
        kind = jax.devices()[0].device_kind.lower()
    except Exception:
        pass
    if "v5" in kind:
        tq_cands, tk_cands = (256, 128), (128,)      # 4x128x128 MXU, low vreg pressure
    else:
        tq_cands, tk_cands = (512, 256, 128), (256, 128)   # v6e/v7x 2x256x256 MXU
    tq = next(c for c in tq_cands if t_padded % c == 0)
    tk = next(c for c in tk_cands if t_padded % c == 0)
    return tq, tk


def scaled_dot_product_attention(q, k, v, mask=None, *, causal=False):
    """softmax(Q K^T * C^{-1/2}, masked) @ V.

    Q/K/V: [B, T, C]; mask: [>=T, >=T] (nonzero = keep). If `causal=True` the
    mask is generated in-kernel (any explicit `mask` argument is assumed to be
    the causal mask and is not streamed).
    """
    B, T, C = q.shape
    assert k.shape == (B, T, C) and v.shape == (B, T, C)
    scale = float(C) ** -0.5

    # Pad T to a multiple of 128 so blocks stay (8,128)/MXU-shaped everywhere
    # (avoids whole-T fallback that blows up VMEM on v7x for awkward T).
    Tp = max(128, -(-T // 128) * 128)
    if Tp != T:
        pad = ((0, 0), (0, Tp - T), (0, 0))
        q = jnp.pad(q, pad)
        k = jnp.pad(k, pad)
        v = jnp.pad(v, pad)

    has_mask = (mask is not None) and (not causal)
    if has_mask:
        # Compact int8 mask (4x less HBM traffic than int32); pad tail with 0
        # (= masked) so padded keys never contribute.
        m8 = (mask[:T, :T] != 0).astype(jnp.int8)
        if Tp != T:
            m8 = jnp.pad(m8, ((0, Tp - T), (0, Tp - T)))

    tq, tk = _pick_tiles(Tp)
    grid = (B, Tp // tq, Tp // tk)

    itemsize = jnp.dtype(q.dtype).itemsize
    # Double-buffered Q/K/V/out blocks (+ int8 mask block) + f32 scratch.
    block_bytes = 2 * ((tq * C + 2 * tk * C + tq * C) * itemsize)
    if has_mask:
        block_bytes += 2 * tq * tk
    scratch_bytes = 4 * tq * (C + 2)
    vmem_limit = int(min(block_bytes + scratch_bytes + (8 << 20), 48 << 20))

    causal_div = 2 if causal else 1
    cost = pl.CostEstimate(
        flops=4 * B * Tp * Tp * C // causal_div,
        transcendentals=B * Tp * Tp // causal_div,
        # Q/out once, K/V re-read once per query block, mask once per (qi,ki).
        bytes_accessed=int(itemsize * B * Tp * C * (2 + 2 * (Tp // tq))
                           + (B * Tp * Tp if has_mask else 0)))

    kernel = functools.partial(
        _sdpa_kernel, scale=scale, causal=causal, has_mask=has_mask,
        t_valid=T, t_total=Tp, tq=tq, tk=tk)

    in_specs = [
        pl.BlockSpec((1, tq, C), lambda b, qi, ki: (b, qi, 0)),   # Q
        pl.BlockSpec((1, tk, C), lambda b, qi, ki: (b, ki, 0)),   # K
        pl.BlockSpec((1, tk, C), lambda b, qi, ki: (b, ki, 0)),   # V
    ]
    args = (q, k, v)
    if has_mask:
        in_specs.append(pl.BlockSpec((tq, tk), lambda b, qi, ki: (qi, ki)))
        args = (q, k, v, m8)

    out = pl.pallas_call(
        kernel,
        out_shape=jax.ShapeDtypeStruct((B, Tp, C), q.dtype),
        grid_spec=pltpu.PrefetchScalarGridSpec(
            num_scalar_prefetch=0,
            grid=grid,
            in_specs=in_specs,
            out_specs=pl.BlockSpec((1, tq, C), lambda b, qi, ki: (b, qi, 0)),
            scratch_shapes=[
                pltpu.VMEM((tq, 1), jnp.float32),    # running max  m_i
                pltpu.VMEM((tq, 1), jnp.float32),    # running denom l_i
                pltpu.VMEM((tq, C), jnp.float32),    # output accumulator
            ],
        ),
        compiler_params=pltpu.CompilerParams(
            dimension_semantics=("parallel", "parallel", "arbitrary"),
            vmem_limit_bytes=vmem_limit),
        cost_estimate=cost,
    )(*args)

    if Tp != T:
        out = out[:, :T, :]
    # TODO(synk): for small head_size (C < 128) pack multiple heads per block
    # so the output lane dim is >=128 (unmasked vst); single-head kept here to
    # match the module interface.
    return out


if __name__ == "__main__":
    B, T, C = 2, 8, 32           # (Batch, Time, Channel/head_size)
    key = jax.random.PRNGKey(0)
    kq, kk, kv = jax.random.split(key, 3)
    Q = jax.random.normal(kq, (B, T, C), jnp.float32)
    K = jax.random.normal(kk, (B, T, C), jnp.float32)
    V = jax.random.normal(kv, (B, T, C), jnp.float32)
    mask = jnp.tril(jnp.ones((T, T), jnp.int32))   # causal mask

    out = scaled_dot_product_attention(Q, K, V, mask)                 # general mask path
    out_c = scaled_dot_product_attention(Q, K, V, mask, causal=True)  # in-kernel causal path
    jax.block_until_ready((out, out_c))

    # Plain-JAX reference (eval-mode dropout = identity).
    att = jnp.einsum("btc,bsc->bts", Q, K) * (C ** -0.5)
    att = jnp.where(mask[None, :, :] == 0, -jnp.inf, att)
    att = jax.nn.softmax(att, axis=-1)
    ref = jnp.einsum("bts,bsc->btc", att, V)

    err = float(jnp.max(jnp.abs(out - ref)))
    err_c = float(jnp.max(jnp.abs(out_c - ref)))
    assert jnp.allclose(out, ref, atol=1e-5, rtol=1e-5), f"mask path err {err}"
    assert jnp.allclose(out_c, ref, atol=1e-5, rtol=1e-5), f"causal path err {err_c}"
    print("KERNEL_OK")
</pallas_src>

<mosaic_0001>
module attributes {stable_mosaic.version = 11 : i64} {
  func.func @_sdpa_kernel(%arg0: i32, %arg1: i32, %arg2: i32, %arg3: memref<1x128x32xf32, #tpu.memory_space<vmem>>, %arg4: memref<1x128x32xf32, #tpu.memory_space<vmem>>, %arg5: memref<1x128x32xf32, #tpu.memory_space<vmem>>, %arg6: memref<128x128xi8, #tpu.memory_space<vmem>>, %arg7: memref<1x128x32xf32, #tpu.memory_space<vmem>>, %arg8: memref<128x1xf32, #tpu.memory_space<vmem>>, %arg9: memref<128x1xf32, #tpu.memory_space<vmem>>, %arg10: memref<128x32xf32, #tpu.memory_space<vmem>>) attributes {dimension_semantics = [#tpu.dimension_semantics<parallel>, #tpu.dimension_semantics<parallel>, #tpu.dimension_semantics<arbitrary>], iteration_bounds = array<i64: 2, 1, 1>, scalar_prefetch = 0 : i64, scratch_operands = 3 : i64, tpu.core_type = #tpu.core_type<tc>, window_params = [{transform_indices = @transform_0, window_bounds = array<i64: 1, 128, 32>}, {transform_indices = @transform_1, window_bounds = array<i64: 1, 128, 32>}, {transform_indices = @transform_2, window_bounds = array<i64: 1, 128, 32>}, {transform_indices = @transform_3, window_bounds = array<i64: 128, 128>}, {transform_indices = @transform_4, window_bounds = array<i64: 1, 128, 32>}]} {
    %c0_i32 = arith.constant 0 : i32
    %0 = arith.cmpi eq, %arg2, %c0_i32 : i32
    %1 = arith.extui %0 : i1 to i32
    %c0_i32_0 = arith.constant 0 : i32
    %2 = arith.cmpi ne, %1, %c0_i32_0 : i32
    scf.if %2 {
      %cst_30 = arith.constant -2.38197633E+38 : f32
      %42 = vector.broadcast %cst_30 : f32 to vector<128x1xf32>
      %c0_31 = arith.constant 0 : index
      %c0_32 = arith.constant 0 : index
      %43 = vector.load %arg8[%c0_31, %c0_32] : memref<128x1xf32, #tpu.memory_space<vmem>>, vector<128x1xf32>
      tpu.vector_store %arg8[%c0_31, %c0_32], %42 {strides = array<i32>} : memref<128x1xf32, #tpu.memory_space<vmem>>, vector<128x1xf32>,
      %cst_33 = arith.constant 0.000000e+00 : f32
      %44 = vector.broadcast %cst_33 : f32 to vector<128x1xf32>
      %c0_34 = arith.constant 0 : index
      %c0_35 = arith.constant 0 : index
      %45 = vector.load %arg9[%c0_34, %c0_35] : memref<128x1xf32, #tpu.memory_space<vmem>>, vector<128x1xf32>
      tpu.vector_store %arg9[%c0_34, %c0_35], %44 {strides = array<i32>} : memref<128x1xf32, #tpu.memory_space<vmem>>, vector<128x1xf32>,
      %cst_36 = arith.constant 0.000000e+00 : f32
      %46 = vector.broadcast %cst_36 : f32 to vector<128x32xf32>
      %c0_37 = arith.constant 0 : index
      %c0_38 = arith.constant 0 : index
      %47 = vector.load %arg10[%c0_37, %c0_38] : memref<128x32xf32, #tpu.memory_space<vmem>>, vector<128x32xf32>
      tpu.vector_store %arg10[%c0_37, %c0_38], %46 {strides = array<i32>} : memref<128x32xf32, #tpu.memory_space<vmem>>, vector<128x32xf32>,
    } else {
    }
    %c0 = arith.constant 0 : index
    %c0_1 = arith.constant 0 : index
    %c0_2 = arith.constant 0 : index
    %3 = vector.load %arg3[%c0, %c0_1, %c0_2] : memref<1x128x32xf32, #tpu.memory_space<vmem>>, vector<1x128x32xf32>
    %4 = vector.shape_cast %3 : vector<1x128x32xf32> to vector<128x32xf32>
    %c0_3 = arith.constant 0 : index
    %c0_4 = arith.constant 0 : index
    %c0_5 = arith.constant 0 : index
    %5 = vector.load %arg4[%c0_3, %c0_4, %c0_5] : memref<1x128x32xf32, #tpu.memory_space<vmem>>, vector<1x128x32xf32>
    %6 = vector.shape_cast %5 : vector<1x128x32xf32> to vector<128x32xf32>
    %cst = arith.constant dense<0.000000e+00> : vector<128x128xf32>
    %7 = tpu.matmul %4, %6, %cst {dimension_numbers = #tpu.dot_dimension_numbers<[1], [1], [0], [0], [0, 0, 1, 0], [], []>} : vector<128x32xf32>, vector<128x32xf32>, vector<128x128xf32> -> vector<128x128xf32>
    %cst_6 = arith.constant 0.176776692 : f32
    %8 = vector.broadcast %cst_6 : f32 to vector<128x128xf32>
    %9 = arith.mulf %7, %8 : vector<128x128xf32>
    %c0_7 = arith.constant 0 : index
    %c0_8 = arith.constant 0 : index
    %10 = vector.load %arg6[%c0_7, %c0_8] : memref<128x128xi8, #tpu.memory_space<vmem>>, vector<128x128xi8>
    %c0_i8 = arith.constant 0 : i8
    %11 = vector.broadcast %c0_i8 : i8 to vector<128x128xi8>
    %12 = arith.cmpi ne, %10, %11 : vector<128x128xi8>
    %cst_9 = arith.constant -2.38197633E+38 : f32
    %13 = vector.broadcast %cst_9 : f32 to vector<128x128xf32>
    %14 = arith.select %12, %9, %13 : vector<128x128xi1>, vector<128x128xf32>
    %c0_10 = arith.constant 0 : index
    %c0_11 = arith.constant 0 : index
    %15 = vector.load %arg8[%c0_10, %c0_11] : memref<128x1xf32, #tpu.memory_space<vmem>>, vector<128x1xf32>
    %cst_12 = arith.constant dense<0xFF800000> : vector<128xf32>
    %16 = vector.multi_reduction <maximumf>, %14, %cst_12 [1] : vector<128x128xf32> to vector<128xf32>
    %17 = vector.shape_cast %16 : vector<128xf32> to vector<128x1xf32>
    %18 = arith.maximumf %15, %17 : vector<128x1xf32>
    %19 = arith.subf %15, %18 : vector<128x1xf32>
    %20 = math.exp %19 : vector<128x1xf32>
    %21 = vector.broadcast %18 : vector<128x1xf32> to vector<128x128xf32>
    %22 = arith.subf %14, %21 : vector<128x128xf32>
    %23 = math.exp %22 : vector<128x128xf32>
    %c0_13 = arith.constant 0 : index
    %c0_14 = arith.constant 0 : index
    %24 = vector.load %arg9[%c0_13, %c0_14] : memref<128x1xf32, #tpu.memory_space<vmem>>, vector<128x1xf32>
    %25 = arith.mulf %20, %24 : vector<128x1xf32>
    %cst_15 = arith.constant dense<0.000000e+00> : vector<128xf32>
    %26 = vector.multi_reduction <add>, %23, %cst_15 [1] : vector<128x128xf32> to vector<128xf32>
    %27 = vector.shape_cast %26 : vector<128xf32> to vector<128x1xf32>
    %28 = arith.addf %25, %27 : vector<128x1xf32>
    %c0_16 = arith.constant 0 : index
    %c0_17 = arith.constant 0 : index
    %29 = vector.load %arg9[%c0_16, %c0_17] : memref<128x1xf32, #tpu.memory_space<vmem>>, vector<128x1xf32>
    tpu.vector_store %arg9[%c0_16, %c0_17], %28 {strides = array<i32>} : memref<128x1xf32, #tpu.memory_space<vmem>>, vector<128x1xf32>,
    %c0_18 = arith.constant 0 : index
    %c0_19 = arith.constant 0 : index
    %30 = vector.load %arg10[%c0_18, %c0_19] : memref<128x32xf32, #tpu.memory_space<vmem>>, vector<128x32xf32>
    %31 = vector.broadcast %20 : vector<128x1xf32> to vector<128x32xf32>
    %32 = arith.mulf %31, %30 : vector<128x32xf32>
    %c0_20 = arith.constant 0 : index
    %c0_21 = arith.constant 0 : index
    %c0_22 = arith.constant 0 : index
    %33 = vector.load %arg5[%c0_20, %c0_21, %c0_22] : memref<1x128x32xf32, #tpu.memory_space<vmem>>, vector<1x128x32xf32>
    %34 = vector.shape_cast %33 : vector<1x128x32xf32> to vector<128x32xf32>
    %cst_23 = arith.constant dense<0.000000e+00> : vector<128x32xf32>
    %35 = tpu.matmul %23, %34, %cst_23 {dimension_numbers = #tpu.dot_dimension_numbers<[1], [0], [0], [1], [0, 0, 1, 1], [], []>} : vector<128x128xf32>, vector<128x32xf32>, vector<128x32xf32> -> vector<128x32xf32>
    %36 = arith.addf %32, %35 : vector<128x32xf32>
    %c0_24 = arith.constant 0 : index
    %c0_25 = arith.constant 0 : index
    %37 = vector.load %arg10[%c0_24, %c0_25] : memref<128x32xf32, #tpu.memory_space<vmem>>, vector<128x32xf32>
    tpu.vector_store %arg10[%c0_24, %c0_25], %36 {strides = array<i32>} : memref<128x32xf32, #tpu.memory_space<vmem>>, vector<128x32xf32>,
    %c0_26 = arith.constant 0 : index
    %c0_27 = arith.constant 0 : index
    %38 = vector.load %arg8[%c0_26, %c0_27] : memref<128x1xf32, #tpu.memory_space<vmem>>, vector<128x1xf32>
    tpu.vector_store %arg8[%c0_26, %c0_27], %18 {strides = array<i32>} : memref<128x1xf32, #tpu.memory_space<vmem>>, vector<128x1xf32>,
    %c0_i32_28 = arith.constant 0 : i32
    %39 = arith.cmpi eq, %arg2, %c0_i32_28 : i32
    %40 = arith.extui %39 : i1 to i32
    %c0_i32_29 = arith.constant 0 : i32
    %41 = arith.cmpi ne, %40, %c0_i32_29 : i32
    scf.if %41 {
      %c0_30 = arith.constant 0 : index
      %c0_31 = arith.constant 0 : index
      %42 = vector.load %arg10[%c0_30, %c0_31] : memref<128x32xf32, #tpu.memory_space<vmem>>, vector<128x32xf32>
      %c0_32 = arith.constant 0 : index
      %c0_33 = arith.constant 0 : index
      %43 = vector.load %arg9[%c0_32, %c0_33] : memref<128x1xf32, #tpu.memory_space<vmem>>, vector<128x1xf32>
      %44 = tpu.reciprocal %43 : vector<128x1xf32> -> vector<128x1xf32>
      %45 = vector.broadcast %44 : vector<128x1xf32> to vector<128x32xf32>
      %46 = arith.mulf %42, %45 : vector<128x32xf32>
      %c0_34 = arith.constant 0 : index
      %c0_35 = arith.constant 0 : index
      %c0_36 = arith.constant 0 : index
      %47 = vector.load %arg7[%c0_34, %c0_35, %c0_36] : memref<1x128x32xf32, #tpu.memory_space<vmem>>, vector<1x128x32xf32>
      %48 = vector.shape_cast %47 : vector<1x128x32xf32> to vector<128x32xf32>
      %49 = vector.shape_cast %46 : vector<128x32xf32> to vector<1x128x32xf32>
      tpu.vector_store %arg7[%c0_34, %c0_35, %c0_36], %49 {strides = array<i32>} : memref<1x128x32xf32, #tpu.memory_space<vmem>>, vector<1x128x32xf32>,
    } else {
    }
    return
  }
  func.func @transform_0(%arg0: i32, %arg1: i32, %arg2: i32) -> (i32, i32, i32) {
    %c0_i32 = arith.constant 0 : i32
    %c0_i32_0 = arith.constant 0 : i32
    return %arg0, %arg1, %c0_i32 : i32, i32, i32
  }
  func.func @transform_1(%arg0: i32, %arg1: i32, %arg2: i32) -> (i32, i32, i32) {
    %c0_i32 = arith.constant 0 : i32
    %c0_i32_0 = arith.constant 0 : i32
    return %arg0, %arg2, %c0_i32 : i32, i32, i32
  }
  func.func @transform_2(%arg0: i32, %arg1: i32, %arg2: i32) -> (i32, i32, i32) {
    %c0_i32 = arith.constant 0 : i32
    %c0_i32_0 = arith.constant 0 : i32
    return %arg0, %arg2, %c0_i32 : i32, i32, i32
  }
  func.func @transform_3(%arg0: i32, %arg1: i32, %arg2: i32) -> (i32, i32) {
    %c0_i32 = arith.constant 0 : i32
    return %arg1, %arg2 : i32, i32
  }
  func.func @transform_4(%arg0: i32, %arg1: i32, %arg2: i32) -> (i32, i32, i32) {
    %c0_i32 = arith.constant 0 : i32
    %c0_i32_0 = arith.constant 0 : i32
    return %arg0, %arg1, %c0_i32 : i32, i32, i32
  }
}

</mosaic_0001>

<llo_original>
// kernel: tpu_custom_call.1
$region0: #{tpu_custom_call.1}
  #allocation0 [shape = 'u32[]', space=smem, size = 0x4, offset = 0x4, fixed_abs, tag = 'smem constant byte address 0x4 - core index']
  #allocation1 [shape = 'u32[144,128]{1,0:T(1,128)}', space=vmem, size = 0x12000, scoped, tag = 'internal scratch']
  #allocation2 [shape = 'f32[128,1]{1,0:T(8,128)}', space=vmem, size = 0x10000, scoped, tag = 'scratch operand']
  #allocation3 [shape = 'f32[128,1]{1,0:T(8,128)}', space=vmem, size = 0x10000, scoped, tag = 'scratch operand']
  #allocation4 [shape = 'f32[128,32]{1,0:T(8,128)}', space=vmem, size = 0x10000, scoped, tag = 'scratch operand']
  %s0 = inlined_call_operand.vmem [shape: f32[2,128,32], index: 0, kind: input, shape index: {}]
  %s1 = inlined_call_operand.vmem [shape: f32[2,128,32], index: 1, kind: input, shape index: {}]
  %s2 = inlined_call_operand.vmem [shape: f32[2,128,32], index: 2, kind: input, shape index: {}]
  %s3 = inlined_call_operand.vmem [shape: s8[128,128], index: 3, kind: input, shape index: {}]
  %s4 = inlined_call_operand.vmem [shape: f32[2,128,32], index: 4, kind: output, shape index: {}]
  %s5 = sld [smem:[#allocation0]]
  $region57: #{tpu_custom_call.1} parent=0
    _
  %s7 = ssub.s32 1, %s5
  %s8 = scalar_select 0, %s7, %s5
  loop: start=0, step=1, limit=4
  $region2: #{tpu_custom_call.1} parent=0 // loop_pre_header
    _
  $region3: #{tpu_custom_call.1} parent=0 // loop_header
    %s10 = sphi 0, %s14
    %p11 = scmp.ge.s32.totalorder %s10, 4
    %s17 = sphi 0, %s36
    %s18 = sphi 0, %s32
    %s19 = sphi 0, %s28
    %s20 = sphi 0, %s17
    %s21 = sphi 0, %s18
    %s22 = sphi 0, %s19
    %s23 = sphi 0, %s20
    %s24 = sphi 0, %s21
    %s25 = sphi 0, %s22
    %s41 = sphi 0, %s43
    %s44 = sphi 0, %s41
    %s45 = sphi 0, %s44
    %s61 = sphi 0, %s45
    %s69 = sphi 0, %s71
    %s72 = sphi 0, %s69
    %s73 = sphi 0, %s72
    %s89 = sphi 0, %s73
    %s97 = sphi 0, %s99
    %s100 = sphi 0, %s97
    %s101 = sphi 0, %s100
    %s117 = sphi 0, %s101
    %s125 = sphi 0, %s127
    %s128 = sphi 0, %s125
    %s129 = sphi 0, %s128
    %s145 = sphi 0, %s129
    %s153 = sphi 0, %s155
    %s156 = sphi 0, %s153
    %s157 = sphi 0, %s156
    %s173 = sphi 0, %s157
  $region4: #{tpu_custom_call.1} parent=0 // loop_header_branch
    %13 = sbr.rel (%p11) target = $region8
  $region5: #{tpu_custom_call.1} parent=0 // loop_body
    %s15 = ssub.s32 %s10, 1
    %s16 = ssub.s32 %s10, 2
    %s26 = sadd.s32 1, %s19
    %p27 = scmp.ge.s32.totalorder %s26, 1
    %s28 = scalar_select %p27, 0, %s26
    %s29 = sadd.s32 1, %s18
    %s30 = scalar_select %p27, %s29, %s18
    %p31 = scmp.ge.s32.totalorder %s30, 1
    %s32 = scalar_select %p31, 0, %s30
    %s33 = sadd.s32 1, %s17
    %s34 = scalar_select %p31, %s33, %s17
    %p35 = scmp.ge.s32.totalorder %s34, 2
    %s36 = scalar_select %p35, 0, %s34
    %s37 = ssub.s32 %s17, %s36
    %s38 = ssub.s32 %s18, %s32
    %s39 = sor.u32 %s37, %s38
    %p40 = scmp.eq.s32.totalorder %s39, 0
    %s42 = sadd.s32 %s41, 1
    %s43 = scalar_select %p40, %s41, %s42
    %p46 = pneg %p40
    %p47 = scmp.eq.s32.totalorder %s10, 1
    %p48 = por %p46, %p47
    %p49 = scmp.ne.s32.totalorder %s41, %s44
    %p50 = scmp.eq.s32.totalorder %s10, 0
    %p51 = por %p49, %p50
    %p52 = scmp.ne.s32.totalorder %s41, %s44
    %p53 = scmp.eq.s32.totalorder %s15, 1
    %p54 = por %p52, %p53
    %p55 = scmp.ne.s32.totalorder %s44, %s45
    %p56 = scmp.eq.s32.totalorder %s15, 0
    %p57 = por %p55, %p56
    %p58 = scmp.ne.s32.totalorder %s44, %s45
    %p59 = scmp.eq.s32.totalorder %s16, 1
    %p60 = por %p58, %p59
    %p62 = scmp.ne.s32.totalorder %s45, %s61
    %p63 = scmp.eq.s32.totalorder %s16, 0
    %p64 = por %p62, %p63
    %s65 = ssub.s32 %s17, %s36
    %s66 = ssub.s32 %s19, %s28
    %s67 = sor.u32 %s65, %s66
    %p68 = scmp.eq.s32.totalorder %s67, 0
    %s70 = sadd.s32 %s69, 1
    %s71 = scalar_select %p68, %s69, %s70
    %p74 = pneg %p68
    %p75 = scmp.eq.s32.totalorder %s10, 1
    %p76 = por %p74, %p75
    %p77 = scmp.ne.s32.totalorder %s69, %s72
    %p78 = scmp.eq.s32.totalorder %s10, 0
    %p79 = por %p77, %p78
    %p80 = scmp.ne.s32.totalorder %s69, %s72
    %p81 = scmp.eq.s32.totalorder %s15, 1
    %p82 = por %p80, %p81
    %p83 = scmp.ne.s32.totalorder %s72, %s73
    %p84 = scmp.eq.s32.totalorder %s15, 0
    %p85 = por %p83, %p84
    %p86 = scmp.ne.s32.totalorder %s72, %s73
    %p87 = scmp.eq.s32.totalorder %s16, 1
    %p88 = por %p86, %p87
    %p90 = scmp.ne.s32.totalorder %s73, %s89
    %p91 = scmp.eq.s32.totalorder %s16, 0
    %p92 = por %p90, %p91
    %s93 = ssub.s32 %s17, %s36
    %s94 = ssub.s32 %s19, %s28
    %s95 = sor.u32 %s93, %s94
    %p96 = scmp.eq.s32.totalorder %s95, 0
    %s98 = sadd.s32 %s97, 1
    %s99 = scalar_select %p96, %s97, %s98
    %p102 = pneg %p96
    %p103 = scmp.eq.s32.totalorder %s10, 1
    %p104 = por %p102, %p103
    %p105 = scmp.ne.s32.totalorder %s97, %s100
    %p106 = scmp.eq.s32.totalorder %s10, 0
    %p107 = por %p105, %p106
    %p108 = scmp.ne.s32.totalorder %s97, %s100
    %p109 = scmp.eq.s32.totalorder %s15, 1
    %p110 = por %p108, %p109
    %p111 = scmp.ne.s32.totalorder %s100, %s101
    %p112 = scmp.eq.s32.totalorder %s15, 0
    %p113 = por %p111, %p112
    %p114 = scmp.ne.s32.totalorder %s100, %s101
    %p115 = scmp.eq.s32.totalorder %s16, 1
    %p116 = por %p114, %p115
    %p118 = scmp.ne.s32.totalorder %s101, %s117
    %p119 = scmp.eq.s32.totalorder %s16, 0
    %p120 = por %p118, %p119
    %s121 = ssub.s32 %s18, %s32
    %s122 = ssub.s32 %s19, %s28
    %s123 = sor.u32 %s121, %s122
    %p124 = scmp.eq.s32.totalorder %s123, 0
    %s126 = sadd.s32 %s125, 1
    %s127 = scalar_select %p124, %s125, %s126
    %p130 = pneg %p124
    %p131 = scmp.eq.s32.totalorder %s10, 1
    %p132 = por %p130, %p131
    %p133 = scmp.ne.s32.totalorder %s125, %s128
    %p134 = scmp.eq.s32.totalorder %s10, 0
    %p135 = por %p133, %p134
    %p136 = scmp.ne.s32.totalorder %s125, %s128
    %p137 = scmp.eq.s32.totalorder %s15, 1
    %p138 = por %p136, %p137
    %p139 = scmp.ne.s32.totalorder %s128, %s129
    %p140 = scmp.eq.s32.totalorder %s15, 0
    %p141 = por %p139, %p140
    %p142 = scmp.ne.s32.totalorder %s128, %s129
    %p143 = scmp.eq.s32.totalorder %s16, 1
    %p144 = por %p142, %p143
    %p146 = scmp.ne.s32.totalorder %s129, %s145
    %p147 = scmp.eq.s32.totalorder %s16, 0
    %p148 = por %p146, %p147
    %s149 = ssub.s32 %s17, %s36
    %s150 = ssub.s32 %s18, %s32
    %s151 = sor.u32 %s149, %s150
    %p152 = scmp.eq.s32.totalorder %s151, 0
    %s154 = sadd.s32 %s153, 1
    %s155 = scalar_select %p152, %s153, %s154
    %p158 = pneg %p152
    %p159 = scmp.eq.s32.totalorder %s10, 1
    %p160 = por %p158, %p159
    %p161 = scmp.ne.s32.totalorder %s153, %s156
    %p162 = scmp.eq.s32.totalorder %s10, 0
    %p163 = por %p161, %p162
    %p164 = scmp.ne.s32.totalorder %s153, %s156
    %p165 = scmp.eq.s32.totalorder %s15, 1
    %p166 = por %p164, %p165
    %p167 = scmp.ne.s32.totalorder %s156, %s157
    %p168 = scmp.eq.s32.totalorder %s15, 0
    %p169 = por %p167, %p168
    %p170 = scmp.ne.s32.totalorder %s156, %s157
    %p171 = scmp.eq.s32.totalorder %s16, 1
    %p172 = por %p170, %p171
    %p174 = scmp.ne.s32.totalorder %s157, %s173
    %p175 = scmp.eq.s32.totalorder %s16, 0
    %p176 = por %p174, %p175
    %p177 = scmp.le.s32.totalorder 1, %s10
    %p178 = scmp.lt.s32.totalorder %s10, 3
    %p179 = pnand %p177, %p178
    %p180 = pneg %p179
    // Predicated region
    $region9: #{tpu_custom_call.1} parent=5 // pred_check
      _
    $region10: #{tpu_custom_call.1} parent=5 // pred_check_branch
      %182 = sbr.rel (%p179) target = $region12
    $region11: #{tpu_custom_call.1} parent=5 // pred_region
      %s183 = ssub.s32 %s10, 1
      // Predicated region
      $region13: #{tpu_custom_call.1} parent=11 // pred_check
        %p184 = pneg %p141
      $region14: #{tpu_custom_call.1} parent=11 // pred_check_branch
        %186 = sbr.rel (%p184) target = $region16
      $region15: #{tpu_custom_call.1} parent=11 // pred_region
        %s187 = smul.u32 4, %s21
        %p188 = scmp.lt.s32.totalorder %s187, 3
        %s189 = scalar_select %p188, %s187, 3
        %p190 = scmp.lt.s32.totalorder %s22, 0
        %s191 = scalar_select %p190, %s22, 0
        %s192 = sadd.s32 %s191, %s189
        %s193 = smul.addr %s192, 8
        %s194 = scalar_lea.vmem %s3, %s193
        %s195 = smul.u32 4, %s21
      $region16: #{tpu_custom_call.1} parent=11 // pred_fallthru
        _
    $region12: #{tpu_custom_call.1} parent=5 // pred_fallthru
      _
    %p196 = scmp.lt.s32.totalorder %s10, 2
    // Predicated region
    $region17: #{tpu_custom_call.1} parent=5 // pred_check
      %p197 = pneg %p196
    $region18: #{tpu_custom_call.1} parent=5 // pred_check_branch
      %199 = sbr.rel (%p197) target = $region20
    $region19: #{tpu_custom_call.1} parent=5 // pred_region
      // Predicated region
      $region21: #{tpu_custom_call.1} parent=19 // pred_check
        %p200 = pneg %p51
      $region22: #{tpu_custom_call.1} parent=19 // pred_check_branch
        %202 = sbr.rel (%p200) target = $region24
      $region23: #{tpu_custom_call.1} parent=19 // pred_region
        %s203 = smul.u32 16, %s18
        %p204 = scmp.lt.s32.totalorder %s17, 1
        %s205 = scalar_select %p204, %s17, 1
        %p206 = scmp.lt.s32.totalorder %s203, 15
        %s207 = scalar_select %p206, %s203, 15
        %s208 = smul.addr %s205, 16
        %s209 = sadd.s32 %s207, %s208
        %s210 = smul.addr %s209, 8
        %s211 = scalar_lea.vmem %s0, %s210
        %s212 = smul.u32 16, %s18
      $region24: #{tpu_custom_call.1} parent=19 // pred_fallthru
        _
      // Predicated region
      $region25: #{tpu_custom_call.1} parent=19 // pred_check
        %p213 = pneg %p79
      $region26: #{tpu_custom_call.1} parent=19 // pred_check_branch
        %215 = sbr.rel (%p213) target = $region28
      $region27: #{tpu_custom_call.1} parent=19 // pred_region
        %s216 = smul.u32 16, %s19
        %p217 = scmp.lt.s32.totalorder %s17, 1
        %s218 = scalar_select %p217, %s17, 1
        %p219 = scmp.lt.s32.totalorder %s216, 15
        %s220 = scalar_select %p219, %s216, 15
        %s221 = smul.addr %s218, 16
        %s222 = sadd.s32 %s220, %s221
        %s223 = smul.addr %s222, 8
        %s224 = scalar_lea.vmem %s1, %s223
        %s225 = smul.u32 16, %s19
      $region28: #{tpu_custom_call.1} parent=19 // pred_fallthru
        _
      // Predicated region
      $region29: #{tpu_custom_call.1} parent=19 // pred_check
        %p226 = pneg %p107
      $region30: #{tpu_custom_call.1} parent=19 // pred_check_branch
        %228 = sbr.rel (%p226) target = $region32
      $region31: #{tpu_custom_call.1} parent=19 // pred_region
        %s229 = smul.u32 16, %s19
        %p230 = scmp.lt.s32.totalorder %s17, 1
        %s231 = scalar_select %p230, %s17, 1
        %p232 = scmp.lt.s32.totalorder %s229, 15
        %s233 = scalar_select %p232, %s229, 15
        %s234 = smul.addr %s231, 16
        %s235 = sadd.s32 %s233, %s234
        %s236 = smul.addr %s235, 8
        %s237 = scalar_lea.vmem %s2, %s236
        %s238 = smul.u32 16, %s19
      $region32: #{tpu_custom_call.1} parent=19 // pred_fallthru
        _
    $region20: #{tpu_custom_call.1} parent=5 // pred_fallthru
      _
    %p239 = scmp.le.s32.totalorder 1, %s10
    %p240 = scmp.lt.s32.totalorder %s10, 3
    %p241 = pnand %p239, %p240
    %p242 = pneg %p241
    // Predicated region
    $region33: #{tpu_custom_call.1} parent=5 // pred_check
      _
    $region34: #{tpu_custom_call.1} parent=5 // pred_check_branch
      %244 = sbr.rel (%p241) target = $region36
    $region35: #{tpu_custom_call.1} parent=5 // pred_region
      %s245 = ssub.s32 %s10, 1
      %s246 = smul.u32 16, %s21
      %p247 = scmp.lt.s32.totalorder %s20, 1
      %s248 = scalar_select %p247, %s20, 1
      %p249 = scmp.lt.s32.totalorder %s246, 15
      %s250 = scalar_select %p249, %s246, 15
      %s251 = smul.addr %s248, 16
      %s252 = sadd.s32 %s250, %s251
      %s253 = smul.addr %s252, 8
      %s254 = scalar_lea.vmem %s0, %s253
      %p255 = pneg %p57
      %p256 = pneg %p54
      %s257 = smul.u32 16, %s22
      %p258 = scmp.lt.s32.totalorder %s20, 1
      %s259 = scalar_select %p258, %s20, 1
      %p260 = scmp.lt.s32.totalorder %s257, 15
      %s261 = scalar_select %p260, %s257, 15
      %s262 = smul.addr %s259, 16
      %s263 = sadd.s32 %s261, %s262
      %s264 = smul.addr %s263, 8
      %s265 = scalar_lea.vmem %s1, %s264
      %p266 = pneg %p85
      %p267 = pneg %p82
      %s268 = smul.u32 16, %s22
      %p269 = scmp.lt.s32.totalorder %s20, 1
      %s270 = scalar_select %p269, %s20, 1
      %p271 = scmp.lt.s32.totalorder %s268, 15
      %s272 = scalar_select %p271, %s268, 15
      %s273 = smul.addr %s270, 16
      %s274 = sadd.s32 %s272, %s273
      %s275 = smul.addr %s274, 8
      %s276 = scalar_lea.vmem %s2, %s275
      %p277 = pneg %p113
      %p278 = pneg %p110
      %s279 = smul.u32 4, %s21
      %p280 = scmp.lt.s32.totalorder %s279, 3
      %s281 = scalar_select %p280, %s279, 3
      %p282 = scmp.lt.s32.totalorder %s22, 0
      %s283 = scalar_select %p282, %s22, 0
      %s284 = sadd.s32 %s283, %s281
      %s285 = smul.addr %s284, 8
      %s286 = scalar_lea.vmem %s3, %s285
      %p287 = pneg %p141
      %p288 = pneg %p138
      %p289 = pneg %p169
      %p290 = pneg %p166
      %s291 = smul.u32 16, %s21
      %p292 = scmp.lt.s32.totalorder %s20, 1
      %s293 = scalar_select %p292, %s20, 1
      %p294 = scmp.lt.s32.totalorder %s291, 15
      %s295 = scalar_select %p294, %s291, 15
      %s296 = smul.addr %s293, 16
      %s297 = sadd.s32 %s295, %s296
      %s298 = smul.addr %s297, 8
      %s299 = scalar_lea.vmem %s4, %s298
      %s300 = smul.u32 16, %s21
      %p301 = scmp.lt.s32.totalorder %s20, 1
      %s302 = scalar_select %p301, %s20, 1
      %p303 = scmp.lt.s32.totalorder %s300, 15
      %s304 = scalar_select %p303, %s300, 15
      %s305 = smul.addr %s302, 16
      %s306 = sadd.s32 %s304, %s305
      %s307 = smul.addr %s306, 8
      %s308 = scalar_lea.vmem %s0, %s307
      %s309 = smul.u32 16, %s21
      %s310 = smul.u32 16, %s22
      %p311 = scmp.lt.s32.totalorder %s20, 1
      %s312 = scalar_select %p311, %s20, 1
      %p313 = scmp.lt.s32.totalorder %s310, 15
      %s314 = scalar_select %p313, %s310, 15
      %s315 = smul.addr %s312, 16
      %s316 = sadd.s32 %s314, %s315
      %s317 = smul.addr %s316, 8
      %s318 = scalar_lea.vmem %s1, %s317
      %s319 = smul.u32 16, %s22
      %s320 = smul.u32 16, %s22
      %p321 = scmp.lt.s32.totalorder %s20, 1
      %s322 = scalar_select %p321, %s20, 1
      %p323 = scmp.lt.s32.totalorder %s320, 15
      %s324 = scalar_select %p323, %s320, 15
      %s325 = smul.addr %s322, 16
      %s326 = sadd.s32 %s324, %s325
      %s327 = smul.addr %s326, 8
      %s328 = scalar_lea.vmem %s2, %s327
      %s329 = smul.u32 16, %s22
      %s330 = smul.u32 4, %s21
      %p331 = scmp.lt.s32.totalorder %s330, 3
      %s332 = scalar_select %p331, %s330, 3
      %p333 = scmp.lt.s32.totalorder %s22, 0
      %s334 = scalar_select %p333, %s22, 0
      %s335 = sadd.s32 %s334, %s332
      %s336 = smul.addr %s335, 8
      %s337 = scalar_lea.vmem %s3, %s336
      %s338 = smul.u32 4, %s21
      %s339 = smul.u32 16, %s21
      %p340 = scmp.lt.s32.totalorder %s20, 1
      %s341 = scalar_select %p340, %s20, 1
      %p342 = scmp.lt.s32.totalorder %s339, 15
      %s343 = scalar_select %p342, %s339, 15
      %s344 = smul.addr %s341, 16
      %s345 = sadd.s32 %s343, %s344
      %s346 = smul.addr %s345, 8
      %s347 = scalar_lea.vmem %s4, %s346
      %s348 = smul.u32 16, %s21
      %p351 = scmp.eq.s32.totalorder %s22, 0
      // Predicated region
      $region37: #{tpu_custom_call.1} parent=35 // pred_check
        %p352 = pneg %p351
      $region38: #{tpu_custom_call.1} parent=35 // pred_check_branch
        %354 = sbr.rel (%p352) target = $region40
      $region39: #{tpu_custom_call.1} parent=35 // pred_region
        %vm355 = vcmask 7168
        %356 = vst.msk [vmem:[#allocation2] sm:$0xff] %vm355, -2.3819763e+38
        %357 = vst.msk [vmem:[#allocation2 + $0x8] sm:$0xff] %vm355, -2.3819763e+38
        %358 = vst.msk [vmem:[#allocation2 + $0x10] sm:$0xff] %vm355, -2.3819763e+38
        %359 = vst.msk [vmem:[#allocation2 + $0x18] sm:$0xff] %vm355, -2.3819763e+38
        %360 = vst.msk [vmem:[#allocation2 + $0x20] sm:$0xff] %vm355, -2.3819763e+38
        %361 = vst.msk [vmem:[#allocation2 + $0x28] sm:$0xff] %vm355, -2.3819763e+38
        %362 = vst.msk [vmem:[#allocation2 + $0x30] sm:$0xff] %vm355, -2.3819763e+38
        %363 = vst.msk [vmem:[#allocation2 + $0x38] sm:$0xff] %vm355, -2.3819763e+38
        %364 = vst.msk [vmem:[#allocation2 + $0x40] sm:$0xff] %vm355, -2.3819763e+38
        %365 = vst.msk [vmem:[#allocation2 + $0x48] sm:$0xff] %vm355, -2.3819763e+38
        %366 = vst.msk [vmem:[#allocation2 + $0x50] sm:$0xff] %vm355, -2.3819763e+38
        %367 = vst.msk [vmem:[#allocation2 + $0x58] sm:$0xff] %vm355, -2.3819763e+38
        %368 = vst.msk [vmem:[#allocation2 + $0x60] sm:$0xff] %vm355, -2.3819763e+38
        %369 = vst.msk [vmem:[#allocation2 + $0x68] sm:$0xff] %vm355, -2.3819763e+38
        %370 = vst.msk [vmem:[#allocation2 + $0x70] sm:$0xff] %vm355, -2.3819763e+38
        %371 = vst.msk [vmem:[#allocation2 + $0x78] sm:$0xff] %vm355, -2.3819763e+38
        %372 = vst.msk [vmem:[#allocation3] sm:$0xff] %vm355, 0.0
        %373 = vst.msk [vmem:[#allocation3 + $0x8] sm:$0xff] %vm355, 0.0
        %374 = vst.msk [vmem:[#allocation3 + $0x10] sm:$0xff] %vm355, 0.0
        %375 = vst.msk [vmem:[#allocation3 + $0x18] sm:$0xff] %vm355, 0.0
        %376 = vst.msk [vmem:[#allocation3 + $0x20] sm:$0xff] %vm355, 0.0
        %377 = vst.msk [vmem:[#allocation3 + $0x28] sm:$0xff] %vm355, 0.0
        %378 = vst.msk [vmem:[#allocation3 + $0x30] sm:$0xff] %vm355, 0.0
        %379 = vst.msk [vmem:[#allocation3 + $0x38] sm:$0xff] %vm355, 0.0
        %380 = vst.msk [vmem:[#allocation3 + $0x40] sm:$0xff] %vm355, 0.0
        %381 = vst.msk [vmem:[#allocation3 + $0x48] sm:$0xff] %vm355, 0.0
        %382 = vst.msk [vmem:[#allocation3 + $0x50] sm:$0xff] %vm355, 0.0
        %383 = vst.msk [vmem:[#allocation3 + $0x58] sm:$0xff] %vm355, 0.0
        %384 = vst.msk [vmem:[#allocation3 + $0x60] sm:$0xff] %vm355, 0.0
        %385 = vst.msk [vmem:[#allocation3 + $0x68] sm:$0xff] %vm355, 0.0
        %386 = vst.msk [vmem:[#allocation3 + $0x70] sm:$0xff] %vm355, 0.0
        %387 = vst.msk [vmem:[#allocation3 + $0x78] sm:$0xff] %vm355, 0.0
        %vm388 = vcmask 261120
        %389 = vst.msk [vmem:[#allocation4] sm:$0xff] %vm388, 0.0
        %390 = vst.msk [vmem:[#allocation4 + $0x8] sm:$0xff] %vm388, 0.0
        %391 = vst.msk [vmem:[#allocation4 + $0x10] sm:$0xff] %vm388, 0.0
        %392 = vst.msk [vmem:[#allocation4 + $0x18] sm:$0xff] %vm388, 0.0
        %393 = vst.msk [vmem:[#allocation4 + $0x20] sm:$0xff] %vm388, 0.0
        %394 = vst.msk [vmem:[#allocation4 + $0x28] sm:$0xff] %vm388, 0.0
        %395 = vst.msk [vmem:[#allocation4 + $0x30] sm:$0xff] %vm388, 0.0
        %396 = vst.msk [vmem:[#allocation4 + $0x38] sm:$0xff] %vm388, 0.0
        %397 = vst.msk [vmem:[#allocation4 + $0x40] sm:$0xff] %vm388, 0.0
        %398 = vst.msk [vmem:[#allocation4 + $0x48] sm:$0xff] %vm388, 0.0
        %399 = vst.msk [vmem:[#allocation4 + $0x50] sm:$0xff] %vm388, 0.0
        %400 = vst.msk [vmem:[#allocation4 + $0x58] sm:$0xff] %vm388, 0.0
        %401 = vst.msk [vmem:[#allocation4 + $0x60] sm:$0xff] %vm388, 0.0
        %402 = vst.msk [vmem:[#allocation4 + $0x68] sm:$0xff] %vm388, 0.0
        %403 = vst.msk [vmem:[#allocation4 + $0x70] sm:$0xff] %vm388, 0.0
        %404 = vst.msk [vmem:[#allocation4 + $0x78] sm:$0xff] %vm388, 0.0
      $region40: #{tpu_custom_call.1} parent=35 // pred_fallthru
        _
      %v405 = vld [vmem:[%s308] sm:$0xff]
      %v406 = vld [vmem:[%s308 + $0x8] sm:$0xff]
      %v407 = vld [vmem:[%s308 + $0x10] sm:$0xff]
      %v408 = vld [vmem:[%s308 + $0x18] sm:$0xff]
      %v409 = vld [vmem:[%s308 + $0x20] sm:$0xff]
      %v410 = vld [vmem:[%s308 + $0x28] sm:$0xff]
      %v411 = vld [vmem:[%s308 + $0x30] sm:$0xff]
      %v412 = vld [vmem:[%s308 + $0x38] sm:$0xff]
      %v413 = vld [vmem:[%s308 + $0x40] sm:$0xff]
      %v414 = vld [vmem:[%s308 + $0x48] sm:$0xff]
      %v415 = vld [vmem:[%s308 + $0x50] sm:$0xff]
      %v416 = vld [vmem:[%s308 + $0x58] sm:$0xff]
      %v417 = vld [vmem:[%s308 + $0x60] sm:$0xff]
      %v418 = vld [vmem:[%s308 + $0x68] sm:$0xff]
      %v419 = vld [vmem:[%s308 + $0x70] sm:$0xff]
      %v420 = vld [vmem:[%s308 + $0x78] sm:$0xff]
      %v421 = vld [vmem:[%s318] sm:$0xff]
      %v422 = vld [vmem:[%s318 + $0x8] sm:$0xff]
      %v423 = vld [vmem:[%s318 + $0x10] sm:$0xff]
      %v424 = vld [vmem:[%s318 + $0x18] sm:$0xff]
      %v425 = vld [vmem:[%s318 + $0x20] sm:$0xff]
      %v426 = vld [vmem:[%s318 + $0x28] sm:$0xff]
      %v427 = vld [vmem:[%s318 + $0x30] sm:$0xff]
      %v428 = vld [vmem:[%s318 + $0x38] sm:$0xff]
      %v429 = vld [vmem:[%s318 + $0x40] sm:$0xff]
      %v430 = vld [vmem:[%s318 + $0x48] sm:$0xff]
      %v431 = vld [vmem:[%s318 + $0x50] sm:$0xff]
      %v432 = vld [vmem:[%s318 + $0x58] sm:$0xff]
      %v433 = vld [vmem:[%s318 + $0x60] sm:$0xff]
      %v434 = vld [vmem:[%s318 + $0x68] sm:$0xff]
      %v435 = vld [vmem:[%s318 + $0x70] sm:$0xff]
      %v436 = vld [vmem:[%s318 + $0x78] sm:$0xff]
      %vm437 = vcmask 261120
      %v439 = vsel %vm437, %v405, 0
      %v442 = vsel %vm437, %v406, 0
      %v445 = vsel %vm437, %v407, 0
      %v448 = vsel %vm437, %v408, 0
      %v451 = vsel %vm437, %v409, 0
      %v454 = vsel %vm437, %v410, 0
      %v457 = vsel %vm437, %v411, 0
      %v460 = vsel %vm437, %v412, 0
      %v463 = vsel %vm437, %v413, 0
      %v466 = vsel %vm437, %v414, 0
      %v469 = vsel %vm437, %v415, 0
      %v472 = vsel %vm437, %v416, 0
      %v475 = vsel %vm437, %v417, 0
      %v478 = vsel %vm437, %v418, 0
      %v481 = vsel %vm437, %v419, 0
      %v484 = vsel %vm437, %v420, 0
      %v487 = vsel %vm437, %v421, 0
      %v490 = vsel %vm437, %v422, 0
      %v493 = vsel %vm437, %v423, 0
      %v496 = vsel %vm437, %v424, 0
      %v499 = vsel %vm437, %v425, 0
      %v502 = vsel %vm437, %v426, 0
      %v505 = vsel %vm437, %v427, 0
      %v508 = vsel %vm437, %v428, 0
      %v511 = vsel %vm437, %v429, 0
      %v514 = vsel %vm437, %v430, 0
      %v517 = vsel %vm437, %v431, 0
      %v520 = vsel %vm437, %v432, 0
      %v523 = vsel %vm437, %v433, 0
      %v526 = vsel %vm437, %v434, 0
      %v529 = vsel %vm437, %v435, 0
      %v532 = vsel %vm437, %v436, 0
      %534 = vmatprep.subr.mxu0 0.0
      %535 = vmatpush1.xpose.msra.mxu0 %v487
      %536 = vmatprep.subr.mxu0 0.0
      %537 = vmatpush1.xpose.msra.mxu0 %v490
      %538 = vmatprep.subr.mxu0 0.0
      %539 = vmatpush1.xpose.msra.mxu0 %v493
      %540 = vmatprep.subr.mxu0 0.0
      %541 = vmatpush1.xpose.msra.mxu0 %v496
      %542 = vmatprep.subr.mxu0 0.0
      %543 = vmatpush1.xpose.msra.mxu0 %v499
      %544 = vmatprep.subr.mxu0 0.0
      %545 = vmatpush1.xpose.msra.mxu0 %v502
      %546 = vmatprep.subr.mxu0 0.0
      %547 = vmatpush1.xpose.msra.mxu0 %v505
      %548 = vmatprep.subr.mxu0 0.0
      %549 = vmatpush1.xpose.msra.mxu0 %v508
      %550 = vmatprep.subr.mxu0 0.0
      %551 = vmatpush1.xpose.msra.mxu0 %v511
      %552 = vmatprep.subr.mxu0 0.0
      %553 = vmatpush1.xpose.msra.mxu0 %v514
      %554 = vmatprep.subr.mxu0 0.0
      %555 = vmatpush1.xpose.msra.mxu0 %v517
      %556 = vmatprep.subr.mxu0 0.0
      %557 = vmatpush1.xpose.msra.mxu0 %v520
      %558 = vmatprep.subr.mxu0 0.0
      %559 = vmatpush1.xpose.msra.mxu0 %v523
      %560 = vmatprep.subr.mxu0 0.0
      %561 = vmatpush1.xpose.msra.mxu0 %v526
      %562 = vmatprep.subr.mxu0 0.0
      %563 = vmatpush1.xpose.msra.mxu0 %v529
      %564 = vmatprep.subr.mxu0 0.0
      %565 = vmatpush1.xpose.msra.mxu0 %v532
      %566 = vmatprep.subr.mxu0 0.0
      %567 = vmatpush1.xpose.msra.mxu0 0.0
      %568 = vmatprep.subr.mxu0 0.0
      %569 = vmatpush1.xpose.msra.mxu0 0.0
      %570 = vmatprep.subr.mxu0 0.0
      %571 = vmatpush1.xpose.msra.mxu0 0.0
      %572 = vmatprep.subr.mxu0 0.0
      %573 = vmatpush1.xpose.msra.mxu0 0.0
      %574 = vmatprep.subr.mxu0 0.0
      %575 = vmatpush1.xpose.msra.mxu0 0.0
      %576 = vmatprep.subr.mxu0 0.0
      %577 = vmatpush1.xpose.msra.mxu0 0.0
      %578 = vmatprep.subr.mxu0 0.0
      %579 = vmatpush1.xpose.msra.mxu0 0.0
      %580 = vmatprep.subr.mxu0 0.0
      %581 = vmatpush1.xpose.msra.mxu0 0.0
      %582 = vmatprep.subr.mxu0 0.0
      %583 = vmatpush1.xpose.msra.mxu0 0.0
      %584 = vmatprep.subr.mxu0 0.0
      %585 = vmatpush1.xpose.msra.mxu0 0.0
      %586 = vmatprep.subr.mxu0 0.0
      %587 = vmatpush1.xpose.msra.mxu0 0.0
      %588 = vmatprep.subr.mxu0 0.0
      %589 = vmatpush1.xpose.msra.mxu0 0.0
      %590 = vmatprep.subr.mxu0 0.0
      %591 = vmatpush1.xpose.msra.mxu0 0.0
      %592 = vmatprep.subr.mxu0 0.0
      %593 = vmatpush1.xpose.msra.mxu0 0.0
      %594 = vmatprep.subr.mxu0 0.0
      %595 = vmatpush1.xpose.msra.mxu0 0.0
      %596 = vmatprep.subr.mxu0 0.0
      %597 = vmatpush1.xpose.msra.mxu0 0.0
      %598 = vmatprep.mubr.f32.mxu0 0.0
      %599 = vmatmul.mubr.f32.gmra.mrb[0].mxu0 %v439
      %v600 = vpop.f32.mrb[0].mxu0
      %v601 = vadd.f32 0.0, %v600
      %v602 = vpop.f32.mrb[0].mxu0
      %603 = vmatprep.mubr.f32.mxu0 0.0
      %604 = vmatmul.mubr.f32.gmra.mrb[0].mxu0 %v442
      %v605 = vpop.f32.mrb[0].mxu0
      %v606 = vadd.f32 0.0, %v605
      %v607 = vpop.f32.mrb[0].mxu0
      %608 = vmatprep.mubr.f32.mxu0 0.0
      %609 = vmatmul.mubr.f32.gmra.mrb[0].mxu0 %v445
      %v610 = vpop.f32.mrb[0].mxu0
      %v611 = vadd.f32 0.0, %v610
      %v612 = vpop.f32.mrb[0].mxu0
      %613 = vmatprep.mubr.f32.mxu0 0.0
      %614 = vmatmul.mubr.f32.gmra.mrb[0].mxu0 %v448
      %v615 = vpop.f32.mrb[0].mxu0
      %v616 = vadd.f32 0.0, %v615
      %v617 = vpop.f32.mrb[0].mxu0
      %618 = vmatprep.mubr.f32.mxu0 0.0
      %619 = vmatmul.mubr.f32.gmra.mrb[0].mxu0 %v451
      %v620 = vpop.f32.mrb[0].mxu0
      %v621 = vadd.f32 0.0, %v620
      %v622 = vpop.f32.mrb[0].mxu0
      %623 = vmatprep.mubr.f32.mxu0 0.0
      %624 = vmatmul.mubr.f32.gmra.mrb[0].mxu0 %v454
      %v625 = vpop.f32.mrb[0].mxu0
      %v626 = vadd.f32 0.0, %v625
      %v627 = vpop.f32.mrb[0].mxu0
      %628 = vmatprep.mubr.f32.mxu0 0.0
      %629 = vmatmul.mubr.f32.gmra.mrb[0].mxu0 %v457
      %v630 = vpop.f32.mrb[0].mxu0
      %v631 = vadd.f32 0.0, %v630
      %v632 = vpop.f32.mrb[0].mxu0
      %633 = vmatprep.mubr.f32.mxu0 0.0
      %634 = vmatmul.mubr.f32.gmra.mrb[0].mxu0 %v460
      %v635 = vpop.f32.mrb[0].mxu0
      %v636 = vadd.f32 0.0, %v635
      %v637 = vpop.f32.mrb[0].mxu0
      %638 = vmatprep.mubr.f32.mxu0 0.0
      %639 = vmatmul.mubr.f32.gmra.mrb[0].mxu0 %v463
      %v640 = vpop.f32.mrb[0].mxu0
      %v641 = vadd.f32 0.0, %v640
      %v642 = vpop.f32.mrb[0].mxu0
      %643 = vmatprep.mubr.f32.mxu0 0.0
      %644 = vmatmul.mubr.f32.gmra.mrb[0].mxu0 %v466
      %v645 = vpop.f32.mrb[0].mxu0
      %v646 = vadd.f32 0.0, %v645
      %v647 = vpop.f32.mrb[0].mxu0
      %648 = vmatprep.mubr.f32.mxu0 0.0
      %649 = vmatmul.mubr.f32.gmra.mrb[0].mxu0 %v469
      %v650 = vpop.f32.mrb[0].mxu0
      %v651 = vadd.f32 0.0, %v650
      %v652 = vpop.f32.mrb[0].mxu0
      %653 = vmatprep.mubr.f32.mxu0 0.0
      %654 = vmatmul.mubr.f32.gmra.mrb[0].mxu0 %v472
      %v655 = vpop.f32.mrb[0].mxu0
      %v656 = vadd.f32 0.0, %v655
      %v657 = vpop.f32.mrb[0].mxu0
      %658 = vmatprep.mubr.f32.mxu0 0.0
      %659 = vmatmul.mubr.f32.gmra.mrb[0].mxu0 %v475
      %v660 = vpop.f32.mrb[0].mxu0
      %v661 = vadd.f32 0.0, %v660
      %v662 = vpop.f32.mrb[0].mxu0
      %663 = vmatprep.mubr.f32.mxu0 0.0
      %664 = vmatmul.mubr.f32.gmra.mrb[0].mxu0 %v478
      %v665 = vpop.f32.mrb[0].mxu0
      %v666 = vadd.f32 0.0, %v665
      %v667 = vpop.f32.mrb[0].mxu0
      %668 = vmatprep.mubr.f32.mxu0 0.0
      %669 = vmatmul.mubr.f32.gmra.mrb[0].mxu0 %v481
      %v670 = vpop.f32.mrb[0].mxu0
      %v671 = vadd.f32 0.0, %v670
      %v672 = vpop.f32.mrb[0].mxu0
      %673 = vmatprep.mubr.f32.mxu0 0.0
      %674 = vmatmul.mubr.f32.gmra.mrb[0].mxu0 %v484
      %v675 = vpop.f32.mrb[0].mxu0
      %v676 = vadd.f32 0.0, %v675
      %v677 = vpop.f32.mrb[0].mxu0
      %678 = vdwg.mxu0
      %v679 = vmul.f32 %v601, 0.17677669
      %v680 = vmul.f32 %v606, 0.17677669
      %v681 = vmul.f32 %v611, 0.17677669
      %v682 = vmul.f32 %v616, 0.17677669
      %v683 = vmul.f32 %v621, 0.17677669
      %v684 = vmul.f32 %v626, 0.17677669
      %v685 = vmul.f32 %v631, 0.17677669
      %v686 = vmul.f32 %v636, 0.17677669
      %v687 = vmul.f32 %v641, 0.17677669
      %v688 = vmul.f32 %v646, 0.17677669
      %v689 = vmul.f32 %v651, 0.17677669
      %v690 = vmul.f32 %v656, 0.17677669
      %v691 = vmul.f32 %v661, 0.17677669
      %v692 = vmul.f32 %v666, 0.17677669
      %v693 = vmul.f32 %v671, 0.17677669
      %v694 = vmul.f32 %v676, 0.17677669
      %v695 = vld [vmem:[%s337] sm:$0xff]
      %v696 = vld [vmem:[%s337 + $0x8] sm:$0xff]
      %v697 = vld [vmem:[%s337 + $0x10] sm:$0xff]
      %v698 = vld [vmem:[%s337 + $0x18] sm:$0xff]
      %vm699 = vnez %v695
      %vm700 = vnez %v696
      %vm701 = vnez %v697
      %vm702 = vnez %v698
      %v703 = vsel %vm699, 16843009, 0
      %v704 = vsel %vm700, 16843009, 0
      %v705 = vsel %vm701, 16843009, 0
      %v706 = vsel %vm702, 16843009, 0
      %v707 = vunpack.c.0.s8 %v703
      %v708 = vunpack.c.1.s8 %v703
      %v709 = vunpack.c.2.s8 %v703
      %v710 = vunpack.c.3.s8 %v703
      %v711 = vunpack.c.0.s8 %v704
      %v712 = vunpack.c.1.s8 %v704
      %v713 = vunpack.c.2.s8 %v704
      %v714 = vunpack.c.3.s8 %v704
      %v715 = vunpack.c.0.s8 %v705
      %v716 = vunpack.c.1.s8 %v705
      %v717 = vunpack.c.2.s8 %v705
      %v718 = vunpack.c.3.s8 %v705
      %v719 = vunpack.c.0.s8 %v706
      %v720 = vunpack.c.1.s8 %v706
      %v721 = vunpack.c.2.s8 %v706
      %v722 = vunpack.c.3.s8 %v706
      %v723 = vpack.c.b16 %v707, %v707
      %v724 = vpack.c.b8 %v723, %v723
      %v725 = vpack.c.b16 %v708, %v708
      %v726 = vpack.c.b8 %v725, %v725
      %v727 = vpack.c.b16 %v709, %v709
      %v728 = vpack.c.b8 %v727, %v727
      %v729 = vpack.c.b16 %v710, %v710
      %v730 = vpack.c.b8 %v729, %v729
      %v731 = vpack.c.b16 %v711, %v711
      %v732 = vpack.c.b8 %v731, %v731
      %v733 = vpack.c.b16 %v712, %v712
      %v734 = vpack.c.b8 %v733, %v733
      %v735 = vpack.c.b16 %v713, %v713
      %v736 = vpack.c.b8 %v735, %v735
      %v737 = vpack.c.b16 %v714, %v714
      %v738 = vpack.c.b8 %v737, %v737
      %v739 = vpack.c.b16 %v715, %v715
      %v740 = vpack.c.b8 %v739, %v739
      %v741 = vpack.c.b16 %v716, %v716
      %v742 = vpack.c.b8 %v741, %v741
      %v743 = vpack.c.b16 %v717, %v717
      %v744 = vpack.c.b8 %v743, %v743
      %v745 = vpack.c.b16 %v718, %v718
      %v746 = vpack.c.b8 %v745, %v745
      %v747 = vpack.c.b16 %v719, %v719
      %v748 = vpack.c.b8 %v747, %v747
      %v749 = vpack.c.b16 %v720, %v720
      %v750 = vpack.c.b8 %v749, %v749
      %v751 = vpack.c.b16 %v721, %v721
      %v752 = vpack.c.b8 %v751, %v751
      %v753 = vpack.c.b16 %v722, %v722
      %v754 = vpack.c.b8 %v753, %v753
      %vm755 = vnez %v724
      %vm756 = vnez %v726
      %vm757 = vnez %v728
      %vm758 = vnez %v730
      %vm759 = vnez %v732
      %vm760 = vnez %v734
      %vm761 = vnez %v736
      %vm762 = vnez %v738
      %vm763 = vnez %v740
      %vm764 = vnez %v742
      %vm765 = vnez %v744
      %vm766 = vnez %v746
      %vm767 = vnez %v748
      %vm768 = vnez %v750
      %vm769 = vnez %v752
      %vm770 = vnez %v754
      %v771 = vsel %vm755, 16843009, 0
      %v772 = vsel %vm756, 16843009, 0
      %v773 = vsel %vm757, 16843009, 0
      %v774 = vsel %vm758, 16843009, 0
      %v775 = vsel %vm759, 16843009, 0
      %v776 = vsel %vm760, 16843009, 0
      %v777 = vsel %vm761, 16843009, 0
      %v778 = vsel %vm762, 16843009, 0
      %v779 = vsel %vm763, 16843009, 0
      %v780 = vsel %vm764, 16843009, 0
      %v781 = vsel %vm765, 16843009, 0
      %v782 = vsel %vm766, 16843009, 0
      %v783 = vsel %vm767, 16843009, 0
      %v784 = vsel %vm768, 16843009, 0
      %v785 = vsel %vm769, 16843009, 0
      %v786 = vsel %vm770, 16843009, 0
      %v787 = vunpack.c.0.s8 %v771
      %v788 = vunpack.c.0.s8 %v772
      %v789 = vunpack.c.0.s8 %v773
      %v790 = vunpack.c.0.s8 %v774
      %v791 = vunpack.c.0.s8 %v775
      %v792 = vunpack.c.0.s8 %v776
      %v793 = vunpack.c.0.s8 %v777
      %v794 = vunpack.c.0.s8 %v778
      %v795 = vunpack.c.0.s8 %v779
      %v796 = vunpack.c.0.s8 %v780
      %v797 = vunpack.c.0.s8 %v781
      %v798 = vunpack.c.0.s8 %v782
      %v799 = vunpack.c.0.s8 %v783
      %v800 = vunpack.c.0.s8 %v784
      %v801 = vunpack.c.0.s8 %v785
      %v802 = vunpack.c.0.s8 %v786
      %vm803 = vcmp.ne.s32.totalorder %v787, 0
      %vm804 = vcmp.ne.s32.totalorder %v788, 0
      %vm805 = vcmp.ne.s32.totalorder %v789, 0
      %vm806 = vcmp.ne.s32.totalorder %v790, 0
      %vm807 = vcmp.ne.s32.totalorder %v791, 0
      %vm808 = vcmp.ne.s32.totalorder %v792, 0
      %vm809 = vcmp.ne.s32.totalorder %v793, 0
      %vm810 = vcmp.ne.s32.totalorder %v794, 0
      %vm811 = vcmp.ne.s32.totalorder %v795, 0
      %vm812 = vcmp.ne.s32.totalorder %v796, 0
      %vm813 = vcmp.ne.s32.totalorder %v797, 0
      %vm814 = vcmp.ne.s32.totalorder %v798, 0
      %vm815 = vcmp.ne.s32.totalorder %v799, 0
      %vm816 = vcmp.ne.s32.totalorder %v800, 0
      %vm817 = vcmp.ne.s32.totalorder %v801, 0
      %vm818 = vcmp.ne.s32.totalorder %v802, 0
      %v819 = vsel %vm803, %v679, -2.3819763e+38
      %v820 = vsel %vm804, %v680, -2.3819763e+38
      %v821 = vsel %vm805, %v681, -2.3819763e+38
      %v822 = vsel %vm806, %v682, -2.3819763e+38
      %v823 = vsel %vm807, %v683, -2.3819763e+38
      %v824 = vsel %vm808, %v684, -2.3819763e+38
      %v825 = vsel %vm809, %v685, -2.3819763e+38
      %v826 = vsel %vm810, %v686, -2.3819763e+38
      %v827 = vsel %vm811, %v687, -2.3819763e+38
      %v828 = vsel %vm812, %v688, -2.3819763e+38
      %v829 = vsel %vm813, %v689, -2.3819763e+38
      %v830 = vsel %vm814, %v690, -2.3819763e+38
      %v831 = vsel %vm815, %v691, -2.3819763e+38
      %v832 = vsel %vm816, %v692, -2.3819763e+38
      %v833 = vsel %vm817, %v693, -2.3819763e+38
      %v834 = vsel %vm818, %v694, -2.3819763e+38
      %v835 = vld [vmem:[#allocation2] sm:$0xff]
      %v836 = vld [vmem:[#allocation2 + $0x8] sm:$0xff]
      %v837 = vld [vmem:[#allocation2 + $0x10] sm:$0xff]
      %v838 = vld [vmem:[#allocation2 + $0x18] sm:$0xff]
      %v839 = vld [vmem:[#allocation2 + $0x20] sm:$0xff]
      %v840 = vld [vmem:[#allocation2 + $0x28] sm:$0xff]
      %v841 = vld [vmem:[#allocation2 + $0x30] sm:$0xff]
      %v842 = vld [vmem:[#allocation2 + $0x38] sm:$0xff]
      %v843 = vld [vmem:[#allocation2 + $0x40] sm:$0xff]
      %v844 = vld [vmem:[#allocation2 + $0x48] sm:$0xff]
      %v845 = vld [vmem:[#allocation2 + $0x50] sm:$0xff]
      %v846 = vld [vmem:[#allocation2 + $0x58] sm:$0xff]
      %v847 = vld [vmem:[#allocation2 + $0x60] sm:$0xff]
      %v848 = vld [vmem:[#allocation2 + $0x68] sm:$0xff]
      %v849 = vld [vmem:[#allocation2 + $0x70] sm:$0xff]
      %v850 = vld [vmem:[#allocation2 + $0x78] sm:$0xff]
      %851 = vmax.xlane.f32.xlu0 %v819
      %v852 = vpop.xlane.xlu0 %851
      %853 = vmax.xlane.f32.xlu0 %v820
      %v854 = vpop.xlane.xlu0 %853
      %855 = vmax.xlane.f32.xlu0 %v821
      %v856 = vpop.xlane.xlu0 %855
      %857 = vmax.xlane.f32.xlu0 %v822
      %v858 = vpop.xlane.xlu0 %857
      %859 = vmax.xlane.f32.xlu0 %v823
      %v860 = vpop.xlane.xlu0 %859
      %861 = vmax.xlane.f32.xlu0 %v824
      %v862 = vpop.xlane.xlu0 %861
      %863 = vmax.xlane.f32.xlu0 %v825
      %v864 = vpop.xlane.xlu0 %863
      %865 = vmax.xlane.f32.xlu0 %v826
      %v866 = vpop.xlane.xlu0 %865
      %867 = vmax.xlane.f32.xlu0 %v827
      %v868 = vpop.xlane.xlu0 %867
      %869 = vmax.xlane.f32.xlu0 %v828
      %v870 = vpop.xlane.xlu0 %869
      %871 = vmax.xlane.f32.xlu0 %v829
      %v872 = vpop.xlane.xlu0 %871
      %873 = vmax.xlane.f32.xlu0 %v830
      %v874 = vpop.xlane.xlu0 %873
      %875 = vmax.xlane.f32.xlu0 %v831
      %v876 = vpop.xlane.xlu0 %875
      %877 = vmax.xlane.f32.xlu0 %v832
      %v878 = vpop.xlane.xlu0 %877
      %879 = vmax.xlane.f32.xlu0 %v833
      %v880 = vpop.xlane.xlu0 %879
      %881 = vmax.xlane.f32.xlu0 %v834
      %v882 = vpop.xlane.xlu0 %881
      %v883 = vmax.f32 %v835, %v852
      %v884 = vmax.f32 %v836, %v854
      %v885 = vmax.f32 %v837, %v856
      %v886 = vmax.f32 %v838, %v858
      %v887 = vmax.f32 %v839, %v860
      %v888 = vmax.f32 %v840, %v862
      %v889 = vmax.f32 %v841, %v864
      %v890 = vmax.f32 %v842, %v866
      %v891 = vmax.f32 %v843, %v868
      %v892 = vmax.f32 %v844, %v870
      %v893 = vmax.f32 %v845, %v872
      %v894 = vmax.f32 %v846, %v874
      %v895 = vmax.f32 %v847, %v876
      %v896 = vmax.f32 %v848, %v878
      %v897 = vmax.f32 %v849, %v880
      %v898 = vmax.f32 %v850, %v882
      %v899 = vsub.f32 %v835, %v883
      %v900 = vsub.f32 %v836, %v884
      %v901 = vsub.f32 %v837, %v885
      %v902 = vsub.f32 %v838, %v886
      %v903 = vsub.f32 %v839, %v887
      %v904 = vsub.f32 %v840, %v888
      %v905 = vsub.f32 %v841, %v889
      %v906 = vsub.f32 %v842, %v890
      %v907 = vsub.f32 %v843, %v891
      %v908 = vsub.f32 %v844, %v892
      %v909 = vsub.f32 %v845, %v893
      %v910 = vsub.f32 %v846, %v894
      %v911 = vsub.f32 %v847, %v895
      %v912 = vsub.f32 %v848, %v896
      %v913 = vsub.f32 %v849, %v897
      %v914 = vsub.f32 %v850, %v898
      %v915 = vmul.f32 %v899, 1.442695
      %v916 = vpow.pop %v915
      %v917 = vmul.f32 %v900, 1.442695
      %v918 = vpow.pop %v917
      %v919 = vmul.f32 %v901, 1.442695
      %v920 = vpow.pop %v919
      %v921 = vmul.f32 %v902, 1.442695
      %v922 = vpow.pop %v921
      %v923 = vmul.f32 %v903, 1.442695
      %v924 = vpow.pop %v923
      %v925 = vmul.f32 %v904, 1.442695
      %v926 = vpow.pop %v925
      %v927 = vmul.f32 %v905, 1.442695
      %v928 = vpow.pop %v927
      %v929 = vmul.f32 %v906, 1.442695
      %v930 = vpow.pop %v929
      %v931 = vmul.f32 %v907, 1.442695
      %v932 = vpow.pop %v931
      %v933 = vmul.f32 %v908, 1.442695
      %v934 = vpow.pop %v933
      %v935 = vmul.f32 %v909, 1.442695
      %v936 = vpow.pop %v935
      %v937 = vmul.f32 %v910, 1.442695
      %v938 = vpow.pop %v937
      %v939 = vmul.f32 %v911, 1.442695
      %v940 = vpow.pop %v939
      %v941 = vmul.f32 %v912, 1.442695
      %v942 = vpow.pop %v941
      %v943 = vmul.f32 %v913, 1.442695
      %v944 = vpow.pop %v943
      %v945 = vmul.f32 %v914, 1.442695
      %v946 = vpow.pop %v945
      %948 = vset.pattern.permute.xlu0 0
      %949 = vperm.xlu0 %948, %v883
      %v950 = vpop.permute.xlu0 %949
      %953 = vset.pattern.permute.xlu0 0
      %954 = vperm.xlu0 %953, %v884
      %v955 = vpop.permute.xlu0 %954
      %958 = vset.pattern.permute.xlu0 0
      %959 = vperm.xlu0 %958, %v885
      %v960 = vpop.permute.xlu0 %959
      %963 = vset.pattern.permute.xlu0 0
      %964 = vperm.xlu0 %963, %v886
      %v965 = vpop.permute.xlu0 %964
      %968 = vset.pattern.permute.xlu0 0
      %969 = vperm.xlu0 %968, %v887
      %v970 = vpop.permute.xlu0 %969
      %973 = vset.pattern.permute.xlu0 0
      %974 = vperm.xlu0 %973, %v888
      %v975 = vpop.permute.xlu0 %974
      %978 = vset.pattern.permute.xlu0 0
      %979 = vperm.xlu0 %978, %v889
      %v980 = vpop.permute.xlu0 %979
      %983 = vset.pattern.permute.xlu0 0
      %984 = vperm.xlu0 %983, %v890
      %v985 = vpop.permute.xlu0 %984
      %988 = vset.pattern.permute.xlu0 0
      %989 = vperm.xlu0 %988, %v891
      %v990 = vpop.permute.xlu0 %989
      %993 = vset.pattern.permute.xlu0 0
      %994 = vperm.xlu0 %993, %v892
      %v995 = vpop.permute.xlu0 %994
      %998 = vset.pattern.permute.xlu0 0
      %999 = vperm.xlu0 %998, %v893
      %v1000 = vpop.permute.xlu0 %999
      %1003 = vset.pattern.permute.xlu0 0
      %1004 = vperm.xlu0 %1003, %v894
      %v1005 = vpop.permute.xlu0 %1004
      %1008 = vset.pattern.permute.xlu0 0
      %1009 = vperm.xlu0 %1008, %v895
      %v1010 = vpop.permute.xlu0 %1009
      %1013 = vset.pattern.permute.xlu0 0
      %1014 = vperm.xlu0 %1013, %v896
      %v1015 = vpop.permute.xlu0 %1014
      %1018 = vset.pattern.permute.xlu0 0
      %1019 = vperm.xlu0 %1018, %v897
      %v1020 = vpop.permute.xlu0 %1019
      %1023 = vset.pattern.permute.xlu0 0
      %1024 = vperm.xlu0 %1023, %v898
      %v1025 = vpop.permute.xlu0 %1024
      %v1027 = vsub.f32 %v819, %v950
      %v1028 = vsub.f32 %v820, %v955
      %v1029 = vsub.f32 %v821, %v960
      %v1030 = vsub.f32 %v822, %v965
      %v1031 = vsub.f32 %v823, %v970
      %v1032 = vsub.f32 %v824, %v975
      %v1033 = vsub.f32 %v825, %v980
      %v1034 = vsub.f32 %v826, %v985
      %v1035 = vsub.f32 %v827, %v990
      %v1036 = vsub.f32 %v828, %v995
      %v1037 = vsub.f32 %v829, %v1000
      %v1038 = vsub.f32 %v830, %v1005
      %v1039 = vsub.f32 %v831, %v1010
      %v1040 = vsub.f32 %v832, %v1015
      %v1041 = vsub.f32 %v833, %v1020
      %v1042 = vsub.f32 %v834, %v1025
      %v1043 = vmul.f32 %v1027, 1.442695
      %v1044 = vpow.pop %v1043
      %v1045 = vmul.f32 %v1028, 1.442695
      %v1046 = vpow.pop %v1045
      %v1047 = vmul.f32 %v1029, 1.442695
      %v1048 = vpow.pop %v1047
      %v1049 = vmul.f32 %v1030, 1.442695
      %v1050 = vpow.pop %v1049
      %v1051 = vmul.f32 %v1031, 1.442695
      %v1052 = vpow.pop %v1051
      %v1053 = vmul.f32 %v1032, 1.442695
      %v1054 = vpow.pop %v1053
      %v1055 = vmul.f32 %v1033, 1.442695
      %v1056 = vpow.pop %v1055
      %v1057 = vmul.f32 %v1034, 1.442695
      %v1058 = vpow.pop %v1057
      %v1059 = vmul.f32 %v1035, 1.442695
      %v1060 = vpow.pop %v1059
      %v1061 = vmul.f32 %v1036, 1.442695
      %v1062 = vpow.pop %v1061
      %v1063 = vmul.f32 %v1037, 1.442695
      %v1064 = vpow.pop %v1063
      %v1065 = vmul.f32 %v1038, 1.442695
      %v1066 = vpow.pop %v1065
      %v1067 = vmul.f32 %v1039, 1.442695
      %v1068 = vpow.pop %v1067
      %v1069 = vmul.f32 %v1040, 1.442695
      %v1070 = vpow.pop %v1069
      %v1071 = vmul.f32 %v1041, 1.442695
      %v1072 = vpow.pop %v1071
      %v1073 = vmul.f32 %v1042, 1.442695
      %v1074 = vpow.pop %v1073
      %v1075 = vld [vmem:[#allocation3] sm:$0xff]
      %v1076 = vld [vmem:[#allocation3 + $0x8] sm:$0xff]
      %v1077 = vld [vmem:[#allocation3 + $0x10] sm:$0xff]
      %v1078 = vld [vmem:[#allocation3 + $0x18] sm:$0xff]
      %v1079 = vld [vmem:[#allocation3 + $0x20] sm:$0xff]
      %v1080 = vld [vmem:[#allocation3 + $0x28] sm:$0xff]
      %v1081 = vld [vmem:[#allocation3 + $0x30] sm:$0xff]
      %v1082 = vld [vmem:[#allocation3 + $0x38] sm:$0xff]
      %v1083 = vld [vmem:[#allocation3 + $0x40] sm:$0xff]
      %v1084 = vld [vmem:[#allocation3 + $0x48] sm:$0xff]
      %v1085 = vld [vmem:[#allocation3 + $0x50] sm:$0xff]
      %v1086 = vld [vmem:[#allocation3 + $0x58] sm:$0xff]
      %v1087 = vld [vmem:[#allocation3 + $0x60] sm:$0xff]
      %v1088 = vld [vmem:[#allocation3 + $0x68] sm:$0xff]
      %v1089 = vld [vmem:[#allocation3 + $0x70] sm:$0xff]
      %v1090 = vld [vmem:[#allocation3 + $0x78] sm:$0xff]
      %v1091 = vmul.f32 %v916, %v1075
      %v1092 = vmul.f32 %v918, %v1076
      %v1093 = vmul.f32 %v920, %v1077
      %v1094 = vmul.f32 %v922, %v1078
      %v1095 = vmul.f32 %v924, %v1079
      %v1096 = vmul.f32 %v926, %v1080
      %v1097 = vmul.f32 %v928, %v1081
      %v1098 = vmul.f32 %v930, %v1082
      %v1099 = vmul.f32 %v932, %v1083
      %v1100 = vmul.f32 %v934, %v1084
      %v1101 = vmul.f32 %v936, %v1085
      %v1102 = vmul.f32 %v938, %v1086
      %v1103 = vmul.f32 %v940, %v1087
      %v1104 = vmul.f32 %v942, %v1088
      %v1105 = vmul.f32 %v944, %v1089
      %v1106 = vmul.f32 %v946, %v1090
      %1107 = vadd.xlane.f32.xlu0 %v1044
      %v1108 = vpop.xlane.xlu0 %1107
      %1109 = vadd.xlane.f32.xlu0 %v1046
      %v1110 = vpop.xlane.xlu0 %1109
      %1111 = vadd.xlane.f32.xlu0 %v1048
      %v1112 = vpop.xlane.xlu0 %1111
      %1113 = vadd.xlane.f32.xlu0 %v1050
      %v1114 = vpop.xlane.xlu0 %1113
      %1115 = vadd.xlane.f32.xlu0 %v1052
      %v1116 = vpop.xlane.xlu0 %1115
      %1117 = vadd.xlane.f32.xlu0 %v1054
      %v1118 = vpop.xlane.xlu0 %1117
      %1119 = vadd.xlane.f32.xlu0 %v1056
      %v1120 = vpop.xlane.xlu0 %1119
      %1121 = vadd.xlane.f32.xlu0 %v1058
      %v1122 = vpop.xlane.xlu0 %1121
      %1123 = vadd.xlane.f32.xlu0 %v1060
      %v1124 = vpop.xlane.xlu0 %1123
      %1125 = vadd.xlane.f32.xlu0 %v1062
      %v1126 = vpop.xlane.xlu0 %1125
      %1127 = vadd.xlane.f32.xlu0 %v1064
      %v1128 = vpop.xlane.xlu0 %1127
      %1129 = vadd.xlane.f32.xlu0 %v1066
      %v1130 = vpop.xlane.xlu0 %1129
      %1131 = vadd.xlane.f32.xlu0 %v1068
      %v1132 = vpop.xlane.xlu0 %1131
      %1133 = vadd.xlane.f32.xlu0 %v1070
      %v1134 = vpop.xlane.xlu0 %1133
      %1135 = vadd.xlane.f32.xlu0 %v1072
      %v1136 = vpop.xlane.xlu0 %1135
      %1137 = vadd.xlane.f32.xlu0 %v1074
      %v1138 = vpop.xlane.xlu0 %1137
      %v1139 = vadd.f32 %v1091, %v1108
      %v1140 = vadd.f32 %v1092, %v1110
      %v1141 = vadd.f32 %v1093, %v1112
      %v1142 = vadd.f32 %v1094, %v1114
      %v1143 = vadd.f32 %v1095, %v1116
      %v1144 = vadd.f32 %v1096, %v1118
      %v1145 = vadd.f32 %v1097, %v1120
      %v1146 = vadd.f32 %v1098, %v1122
      %v1147 = vadd.f32 %v1099, %v1124
      %v1148 = vadd.f32 %v1100, %v1126
      %v1149 = vadd.f32 %v1101, %v1128
      %v1150 = vadd.f32 %v1102, %v1130
      %v1151 = vadd.f32 %v1103, %v1132
      %v1152 = vadd.f32 %v1104, %v1134
      %v1153 = vadd.f32 %v1105, %v1136
      %v1154 = vadd.f32 %v1106, %v1138
      %vm1155 = vcmask 7168
      %1156 = vst.msk [vmem:[#allocation3] sm:$0xff] %vm1155, %v1139
      %1157 = vst.msk [vmem:[#allocation3 + $0x8] sm:$0xff] %vm1155, %v1140
      %1158 = vst.msk [vmem:[#allocation3 + $0x10] sm:$0xff] %vm1155, %v1141
      %1159 = vst.msk [vmem:[#allocation3 + $0x18] sm:$0xff] %vm1155, %v1142
      %1160 = vst.msk [vmem:[#allocation3 + $0x20] sm:$0xff] %vm1155, %v1143
      %1161 = vst.msk [vmem:[#allocation3 + $0x28] sm:$0xff] %vm1155, %v1144
      %1162 = vst.msk [vmem:[#allocation3 + $0x30] sm:$0xff] %vm1155, %v1145
      %1163 = vst.msk [vmem:[#allocation3 + $0x38] sm:$0xff] %vm1155, %v1146
      %1164 = vst.msk [vmem:[#allocation3 + $0x40] sm:$0xff] %vm1155, %v1147
      %1165 = vst.msk [vmem:[#allocation3 + $0x48] sm:$0xff] %vm1155, %v1148
      %1166 = vst.msk [vmem:[#allocation3 + $0x50] sm:$0xff] %vm1155, %v1149
      %1167 = vst.msk [vmem:[#allocation3 + $0x58] sm:$0xff] %vm1155, %v1150
      %1168 = vst.msk [vmem:[#allocation3 + $0x60] sm:$0xff] %vm1155, %v1151
      %1169 = vst.msk [vmem:[#allocation3 + $0x68] sm:$0xff] %vm1155, %v1152
      %1170 = vst.msk [vmem:[#allocation3 + $0x70] sm:$0xff] %vm1155, %v1153
      %1171 = vst.msk [vmem:[#allocation3 + $0x78] sm:$0xff] %vm1155, %v1154
      %v1172 = vld [vmem:[#allocation4] sm:$0xff]
      %v1173 = vld [vmem:[#allocation4 + $0x8] sm:$0xff]
      %v1174 = vld [vmem:[#allocation4 + $0x10] sm:$0xff]
      %v1175 = vld [vmem:[#allocation4 + $0x18] sm:$0xff]
      %v1176 = vld [vmem:[#allocation4 + $0x20] sm:$0xff]
      %v1177 = vld [vmem:[#allocation4 + $0x28] sm:$0xff]
      %v1178 = vld [vmem:[#allocation4 + $0x30] sm:$0xff]
      %v1179 = vld [vmem:[#allocation4 + $0x38] sm:$0xff]
      %v1180 = vld [vmem:[#allocation4 + $0x40] sm:$0xff]
      %v1181 = vld [vmem:[#allocation4 + $0x48] sm:$0xff]
      %v1182 = vld [vmem:[#allocation4 + $0x50] sm:$0xff]
      %v1183 = vld [vmem:[#allocation4 + $0x58] sm:$0xff]
      %v1184 = vld [vmem:[#allocation4 + $0x60] sm:$0xff]
      %v1185 = vld [vmem:[#allocation4 + $0x68] sm:$0xff]
      %v1186 = vld [vmem:[#allocation4 + $0x70] sm:$0xff]
      %v1187 = vld [vmem:[#allocation4 + $0x78] sm:$0xff]
      %1189 = vset.pattern.permute.xlu0 0
      %1190 = vperm.xlu0 %1189, %v916
      %v1191 = vpop.permute.xlu0 %1190
      %1194 = vset.pattern.permute.xlu0 0
      %1195 = vperm.xlu0 %1194, %v918
      %v1196 = vpop.permute.xlu0 %1195
      %1199 = vset.pattern.permute.xlu0 0
      %1200 = vperm.xlu0 %1199, %v920
      %v1201 = vpop.permute.xlu0 %1200
      %1204 = vset.pattern.permute.xlu0 0
      %1205 = vperm.xlu0 %1204, %v922
      %v1206 = vpop.permute.xlu0 %1205
      %1209 = vset.pattern.permute.xlu0 0
      %1210 = vperm.xlu0 %1209, %v924
      %v1211 = vpop.permute.xlu0 %1210
      %1214 = vset.pattern.permute.xlu0 0
      %1215 = vperm.xlu0 %1214, %v926
      %v1216 = vpop.permute.xlu0 %1215
      %1219 = vset.pattern.permute.xlu0 0
      %1220 = vperm.xlu0 %1219, %v928
      %v1221 = vpop.permute.xlu0 %1220
      %1224 = vset.pattern.permute.xlu0 0
      %1225 = vperm.xlu0 %1224, %v930
      %v1226 = vpop.permute.xlu0 %1225
      %1229 = vset.pattern.permute.xlu0 0
      %1230 = vperm.xlu0 %1229, %v932
      %v1231 = vpop.permute.xlu0 %1230
      %1234 = vset.pattern.permute.xlu0 0
      %1235 = vperm.xlu0 %1234, %v934
      %v1236 = vpop.permute.xlu0 %1235
      %1239 = vset.pattern.permute.xlu0 0
      %1240 = vperm.xlu0 %1239, %v936
      %v1241 = vpop.permute.xlu0 %1240
      %1244 = vset.pattern.permute.xlu0 0
      %1245 = vperm.xlu0 %1244, %v938
      %v1246 = vpop.permute.xlu0 %1245
      %1249 = vset.pattern.permute.xlu0 0
      %1250 = vperm.xlu0 %1249, %v940
      %v1251 = vpop.permute.xlu0 %1250
      %1254 = vset.pattern.permute.xlu0 0
      %1255 = vperm.xlu0 %1254, %v942
      %v1256 = vpop.permute.xlu0 %1255
      %1259 = vset.pattern.permute.xlu0 0
      %1260 = vperm.xlu0 %1259, %v944
      %v1261 = vpop.permute.xlu0 %1260
      %1264 = vset.pattern.permute.xlu0 0
      %1265 = vperm.xlu0 %1264, %v946
      %v1266 = vpop.permute.xlu0 %1265
      %v1268 = vmul.f32 %v1191, %v1172
      %v1269 = vmul.f32 %v1196, %v1173
      %v1270 = vmul.f32 %v1201, %v1174
      %v1271 = vmul.f32 %v1206, %v1175
      %v1272 = vmul.f32 %v1211, %v1176
      %v1273 = vmul.f32 %v1216, %v1177
      %v1274 = vmul.f32 %v1221, %v1178
      %v1275 = vmul.f32 %v1226, %v1179
      %v1276 = vmul.f32 %v1231, %v1180
      %v1277 = vmul.f32 %v1236, %v1181
      %v1278 = vmul.f32 %v1241, %v1182
      %v1279 = vmul.f32 %v1246, %v1183
      %v1280 = vmul.f32 %v1251, %v1184
      %v1281 = vmul.f32 %v1256, %v1185
      %v1282 = vmul.f32 %v1261, %v1186
      %v1283 = vmul.f32 %v1266, %v1187
      %v1284 = vld [vmem:[%s328] sm:$0xff]
      %v1285 = vld [vmem:[%s328 + $0x8] sm:$0xff]
      %v1286 = vld [vmem:[%s328 + $0x10] sm:$0xff]
      %v1287 = vld [vmem:[%s328 + $0x18] sm:$0xff]
      %v1288 = vld [vmem:[%s328 + $0x20] sm:$0xff]
      %v1289 = vld [vmem:[%s328 + $0x28] sm:$0xff]
      %v1290 = vld [vmem:[%s328 + $0x30] sm:$0xff]
      %v1291 = vld [vmem:[%s328 + $0x38] sm:$0xff]
      %v1292 = vld [vmem:[%s328 + $0x40] sm:$0xff]
      %v1293 = vld [vmem:[%s328 + $0x48] sm:$0xff]
      %v1294 = vld [vmem:[%s328 + $0x50] sm:$0xff]
      %v1295 = vld [vmem:[%s328 + $0x58] sm:$0xff]
      %v1296 = vld [vmem:[%s328 + $0x60] sm:$0xff]
      %v1297 = vld [vmem:[%s328 + $0x68] sm:$0xff]
      %v1298 = vld [vmem:[%s328 + $0x70] sm:$0xff]
      %v1299 = vld [vmem:[%s328 + $0x78] sm:$0xff]
      %1300 = vmatprep.subr.mxu0 0.0
      %1301 = vmatpush1.msra.mxu0 %v1284
      %1302 = vmatprep.subr.mxu0 0.0
      %1303 = vmatpush1.msra.mxu0 %v1285
      %1304 = vmatprep.subr.mxu0 0.0
      %1305 = vmatpush1.msra.mxu0 %v1286
      %1306 = vmatprep.subr.mxu0 0.0
      %1307 = vmatpush1.msra.mxu0 %v1287
      %1308 = vmatprep.subr.mxu0 0.0
      %1309 = vmatpush1.msra.mxu0 %v1288
      %1310 = vmatprep.subr.mxu0 0.0
      %1311 = vmatpush1.msra.mxu0 %v1289
      %1312 = vmatprep.subr.mxu0 0.0
      %1313 = vmatpush1.msra.mxu0 %v1290
      %1314 = vmatprep.subr.mxu0 0.0
      %1315 = vmatpush1.msra.mxu0 %v1291
      %1316 = vmatprep.subr.mxu0 0.0
      %1317 = vmatpush1.msra.mxu0 %v1292
      %1318 = vmatprep.subr.mxu0 0.0
      %1319 = vmatpush1.msra.mxu0 %v1293
      %1320 = vmatprep.subr.mxu0 0.0
      %1321 = vmatpush1.msra.mxu0 %v1294
      %1322 = vmatprep.subr.mxu0 0.0
      %1323 = vmatpush1.msra.mxu0 %v1295
      %1324 = vmatprep.subr.mxu0 0.0
      %1325 = vmatpush1.msra.mxu0 %v1296
      %1326 = vmatprep.subr.mxu0 0.0
      %1327 = vmatpush1.msra.mxu0 %v1297
      %1328 = vmatprep.subr.mxu0 0.0
      %1329 = vmatpush1.msra.mxu0 %v1298
      %1330 = vmatprep.subr.mxu0 0.0
      %1331 = vmatpush1.msra.mxu0 %v1299
      %1332 = vmatprep.subr.mxu0 0.0
      %1333 = vmatpush1.msra.mxu0 0.0
      %1334 = vmatprep.subr.mxu0 0.0
      %1335 = vmatpush1.msra.mxu0 0.0
      %1336 = vmatprep.subr.mxu0 0.0
      %1337 = vmatpush1.msra.mxu0 0.0
      %1338 = vmatprep.subr.mxu0 0.0
      %1339 = vmatpush1.msra.mxu0 0.0
      %1340 = vmatprep.subr.mxu0 0.0
      %1341 = vmatpush1.msra.mxu0 0.0
      %1342 = vmatprep.subr.mxu0 0.0
      %1343 = vmatpush1.msra.mxu0 0.0
      %1344 = vmatprep.subr.mxu0 0.0
      %1345 = vmatpush1.msra.mxu0 0.0
      %1346 = vmatprep.subr.mxu0 0.0
      %1347 = vmatpush1.msra.mxu0 0.0
      %1348 = vmatprep.subr.mxu0 0.0
      %1349 = vmatpush1.msra.mxu0 0.0
      %1350 = vmatprep.subr.mxu0 0.0
      %1351 = vmatpush1.msra.mxu0 0.0
      %1352 = vmatprep.subr.mxu0 0.0
      %1353 = vmatpush1.msra.mxu0 0.0
      %1354 = vmatprep.subr.mxu0 0.0
      %1355 = vmatpush1.msra.mxu0 0.0
      %1356 = vmatprep.subr.mxu0 0.0
      %1357 = vmatpush1.msra.mxu0 0.0
      %1358 = vmatprep.subr.mxu0 0.0
      %1359 = vmatpush1.msra.mxu0 0.0
      %1360 = vmatprep.subr.mxu0 0.0
      %1361 = vmatpush1.msra.mxu0 0.0
      %1362 = vmatprep.subr.mxu0 0.0
      %1363 = vmatpush1.msra.mxu0 0.0
      %1364 = vmatprep.mubr.f32.mxu0 0.0
      %1365 = vmatmul.mubr.f32.gmra.mrb[0].mxu0 %v1044
      %v1366 = vpop.f32.mrb[0].mxu0
      %v1367 = vadd.f32 0.0, %v1366
      %v1368 = vpop.f32.mrb[0].mxu0
      %1369 = vmatprep.mubr.f32.mxu0 0.0
      %1370 = vmatmul.mubr.f32.gmra.mrb[0].mxu0 %v1046
      %v1371 = vpop.f32.mrb[0].mxu0
      %v1372 = vadd.f32 0.0, %v1371
      %v1373 = vpop.f32.mrb[0].mxu0
      %1374 = vmatprep.mubr.f32.mxu0 0.0
      %1375 = vmatmul.mubr.f32.gmra.mrb[0].mxu0 %v1048
      %v1376 = vpop.f32.mrb[0].mxu0
      %v1377 = vadd.f32 0.0, %v1376
      %v1378 = vpop.f32.mrb[0].mxu0
      %1379 = vmatprep.mubr.f32.mxu0 0.0
      %1380 = vmatmul.mubr.f32.gmra.mrb[0].mxu0 %v1050
      %v1381 = vpop.f32.mrb[0].mxu0
      %v1382 = vadd.f32 0.0, %v1381
      %v1383 = vpop.f32.mrb[0].mxu0
      %1384 = vmatprep.mubr.f32.mxu0 0.0
      %1385 = vmatmul.mubr.f32.gmra.mrb[0].mxu0 %v1052
      %v1386 = vpop.f32.mrb[0].mxu0
      %v1387 = vadd.f32 0.0, %v1386
      %v1388 = vpop.f32.mrb[0].mxu0
      %1389 = vmatprep.mubr.f32.mxu0 0.0
      %1390 = vmatmul.mubr.f32.gmra.mrb[0].mxu0 %v1054
      %v1391 = vpop.f32.mrb[0].mxu0
      %v1392 = vadd.f32 0.0, %v1391
      %v1393 = vpop.f32.mrb[0].mxu0
      %1394 = vmatprep.mubr.f32.mxu0 0.0
      %1395 = vmatmul.mubr.f32.gmra.mrb[0].mxu0 %v1056
      %v1396 = vpop.f32.mrb[0].mxu0
      %v1397 = vadd.f32 0.0, %v1396
      %v1398 = vpop.f32.mrb[0].mxu0
      %1399 = vmatprep.mubr.f32.mxu0 0.0
      %1400 = vmatmul.mubr.f32.gmra.mrb[0].mxu0 %v1058
      %v1401 = vpop.f32.mrb[0].mxu0
      %v1402 = vadd.f32 0.0, %v1401
      %v1403 = vpop.f32.mrb[0].mxu0
      %1404 = vmatprep.mubr.f32.mxu0 0.0
      %1405 = vmatmul.mubr.f32.gmra.mrb[0].mxu0 %v1060
      %v1406 = vpop.f32.mrb[0].mxu0
      %v1407 = vadd.f32 0.0, %v1406
      %v1408 = vpop.f32.mrb[0].mxu0
      %1409 = vmatprep.mubr.f32.mxu0 0.0
      %1410 = vmatmul.mubr.f32.gmra.mrb[0].mxu0 %v1062
      %v1411 = vpop.f32.mrb[0].mxu0
      %v1412 = vadd.f32 0.0, %v1411
      %v1413 = vpop.f32.mrb[0].mxu0
      %1414 = vmatprep.mubr.f32.mxu0 0.0
      %1415 = vmatmul.mubr.f32.gmra.mrb[0].mxu0 %v1064
      %v1416 = vpop.f32.mrb[0].mxu0
      %v1417 = vadd.f32 0.0, %v1416
      %v1418 = vpop.f32.mrb[0].mxu0
      %1419 = vmatprep.mubr.f32.mxu0 0.0
      %1420 = vmatmul.mubr.f32.gmra.mrb[0].mxu0 %v1066
      %v1421 = vpop.f32.mrb[0].mxu0
      %v1422 = vadd.f32 0.0, %v1421
      %v1423 = vpop.f32.mrb[0].mxu0
      %1424 = vmatprep.mubr.f32.mxu0 0.0
      %1425 = vmatmul.mubr.f32.gmra.mrb[0].mxu0 %v1068
      %v1426 = vpop.f32.mrb[0].mxu0
      %v1427 = vadd.f32 0.0, %v1426
      %v1428 = vpop.f32.mrb[0].mxu0
      %1429 = vmatprep.mubr.f32.mxu0 0.0
      %1430 = vmatmul.mubr.f32.gmra.mrb[0].mxu0 %v1070
      %v1431 = vpop.f32.mrb[0].mxu0
      %v1432 = vadd.f32 0.0, %v1431
      %v1433 = vpop.f32.mrb[0].mxu0
      %1434 = vmatprep.mubr.f32.mxu0 0.0
      %1435 = vmatmul.mubr.f32.gmra.mrb[0].mxu0 %v1072
      %v1436 = vpop.f32.mrb[0].mxu0
      %v1437 = vadd.f32 0.0, %v1436
      %v1438 = vpop.f32.mrb[0].mxu0
      %1439 = vmatprep.mubr.f32.mxu0 0.0
      %1440 = vmatmul.mubr.f32.gmra.mrb[0].mxu0 %v1074
      %v1441 = vpop.f32.mrb[0].mxu0
      %v1442 = vadd.f32 0.0, %v1441
      %v1443 = vpop.f32.mrb[0].mxu0
      %1444 = vdwg.mxu0
      %v1445 = vadd.f32 %v1268, %v1367
      %v1446 = vadd.f32 %v1269, %v1372
      %v1447 = vadd.f32 %v1270, %v1377
      %v1448 = vadd.f32 %v1271, %v1382
      %v1449 = vadd.f32 %v1272, %v1387
      %v1450 = vadd.f32 %v1273, %v1392
      %v1451 = vadd.f32 %v1274, %v1397
      %v1452 = vadd.f32 %v1275, %v1402
      %v1453 = vadd.f32 %v1276, %v1407
      %v1454 = vadd.f32 %v1277, %v1412
      %v1455 = vadd.f32 %v1278, %v1417
      %v1456 = vadd.f32 %v1279, %v1422
      %v1457 = vadd.f32 %v1280, %v1427
      %v1458 = vadd.f32 %v1281, %v1432
      %v1459 = vadd.f32 %v1282, %v1437
      %v1460 = vadd.f32 %v1283, %v1442
      %1461 = vst.msk [vmem:[#allocation4] sm:$0xff] %vm437, %v1445
      %1462 = vst.msk [vmem:[#allocation4 + $0x8] sm:$0xff] %vm437, %v1446
      %1463 = vst.msk [vmem:[#allocation4 + $0x10] sm:$0xff] %vm437, %v1447
      %1464 = vst.msk [vmem:[#allocation4 + $0x18] sm:$0xff] %vm437, %v1448
      %1465 = vst.msk [vmem:[#allocation4 + $0x20] sm:$0xff] %vm437, %v1449
      %1466 = vst.msk [vmem:[#allocation4 + $0x28] sm:$0xff] %vm437, %v1450
      %1467 = vst.msk [vmem:[#allocation4 + $0x30] sm:$0xff] %vm437, %v1451
      %1468 = vst.msk [vmem:[#allocation4 + $0x38] sm:$0xff] %vm437, %v1452
      %1469 = vst.msk [vmem:[#allocation4 + $0x40] sm:$0xff] %vm437, %v1453
      %1470 = vst.msk [vmem:[#allocation4 + $0x48] sm:$0xff] %vm437, %v1454
      %1471 = vst.msk [vmem:[#allocation4 + $0x50] sm:$0xff] %vm437, %v1455
      %1472 = vst.msk [vmem:[#allocation4 + $0x58] sm:$0xff] %vm437, %v1456
      %1473 = vst.msk [vmem:[#allocation4 + $0x60] sm:$0xff] %vm437, %v1457
      %1474 = vst.msk [vmem:[#allocation4 + $0x68] sm:$0xff] %vm437, %v1458
      %1475 = vst.msk [vmem:[#allocation4 + $0x70] sm:$0xff] %vm437, %v1459
      %1476 = vst.msk [vmem:[#allocation4 + $0x78] sm:$0xff] %vm437, %v1460
      %1477 = vst.msk [vmem:[#allocation2] sm:$0xff] %vm1155, %v883
      %1478 = vst.msk [vmem:[#allocation2 + $0x8] sm:$0xff] %vm1155, %v884
      %1479 = vst.msk [vmem:[#allocation2 + $0x10] sm:$0xff] %vm1155, %v885
      %1480 = vst.msk [vmem:[#allocation2 + $0x18] sm:$0xff] %vm1155, %v886
      %1481 = vst.msk [vmem:[#allocation2 + $0x20] sm:$0xff] %vm1155, %v887
      %1482 = vst.msk [vmem:[#allocation2 + $0x28] sm:$0xff] %vm1155, %v888
      %1483 = vst.msk [vmem:[#allocation2 + $0x30] sm:$0xff] %vm1155, %v889
      %1484 = vst.msk [vmem:[#allocation2 + $0x38] sm:$0xff] %vm1155, %v890
      %1485 = vst.msk [vmem:[#allocation2 + $0x40] sm:$0xff] %vm1155, %v891
      %1486 = vst.msk [vmem:[#allocation2 + $0x48] sm:$0xff] %vm1155, %v892
      %1487 = vst.msk [vmem:[#allocation2 + $0x50] sm:$0xff] %vm1155, %v893
      %1488 = vst.msk [vmem:[#allocation2 + $0x58] sm:$0xff] %vm1155, %v894
      %1489 = vst.msk [vmem:[#allocation2 + $0x60] sm:$0xff] %vm1155, %v895
      %1490 = vst.msk [vmem:[#allocation2 + $0x68] sm:$0xff] %vm1155, %v896
      %1491 = vst.msk [vmem:[#allocation2 + $0x70] sm:$0xff] %vm1155, %v897
      %1492 = vst.msk [vmem:[#allocation2 + $0x78] sm:$0xff] %vm1155, %v898
      // Predicated region
      $region41: #{tpu_custom_call.1} parent=35 // pred_check
        %p1493 = pneg %p351
      $region42: #{tpu_custom_call.1} parent=35 // pred_check_branch
        %1495 = sbr.rel (%p1493) target = $region44
      $region43: #{tpu_custom_call.1} parent=35 // pred_region
        %v1496 = vld [vmem:[#allocation4] sm:$0xff]
        %v1497 = vld [vmem:[#allocation4 + $0x8] sm:$0xff]
        %v1498 = vld [vmem:[#allocation4 + $0x10] sm:$0xff]
        %v1499 = vld [vmem:[#allocation4 + $0x18] sm:$0xff]
        %v1500 = vld [vmem:[#allocation4 + $0x20] sm:$0xff]
        %v1501 = vld [vmem:[#allocation4 + $0x28] sm:$0xff]
        %v1502 = vld [vmem:[#allocation4 + $0x30] sm:$0xff]
        %v1503 = vld [vmem:[#allocation4 + $0x38] sm:$0xff]
        %v1504 = vld [vmem:[#allocation4 + $0x40] sm:$0xff]
        %v1505 = vld [vmem:[#allocation4 + $0x48] sm:$0xff]
        %v1506 = vld [vmem:[#allocation4 + $0x50] sm:$0xff]
        %v1507 = vld [vmem:[#allocation4 + $0x58] sm:$0xff]
        %v1508 = vld [vmem:[#allocation4 + $0x60] sm:$0xff]
        %v1509 = vld [vmem:[#allocation4 + $0x68] sm:$0xff]
        %v1510 = vld [vmem:[#allocation4 + $0x70] sm:$0xff]
        %v1511 = vld [vmem:[#allocation4 + $0x78] sm:$0xff]
        %v1512 = vld [vmem:[#allocation3] sm:$0xff]
        %v1513 = vld [vmem:[#allocation3 + $0x8] sm:$0xff]
        %v1514 = vld [vmem:[#allocation3 + $0x10] sm:$0xff]
        %v1515 = vld [vmem:[#allocation3 + $0x18] sm:$0xff]
        %v1516 = vld [vmem:[#allocation3 + $0x20] sm:$0xff]
        %v1517 = vld [vmem:[#allocation3 + $0x28] sm:$0xff]
        %v1518 = vld [vmem:[#allocation3 + $0x30] sm:$0xff]
        %v1519 = vld [vmem:[#allocation3 + $0x38] sm:$0xff]
        %v1520 = vld [vmem:[#allocation3 + $0x40] sm:$0xff]
        %v1521 = vld [vmem:[#allocation3 + $0x48] sm:$0xff]
        %v1522 = vld [vmem:[#allocation3 + $0x50] sm:$0xff]
        %v1523 = vld [vmem:[#allocation3 + $0x58] sm:$0xff]
        %v1524 = vld [vmem:[#allocation3 + $0x60] sm:$0xff]
        %v1525 = vld [vmem:[#allocation3 + $0x68] sm:$0xff]
        %v1526 = vld [vmem:[#allocation3 + $0x70] sm:$0xff]
        %v1527 = vld [vmem:[#allocation3 + $0x78] sm:$0xff]
        %v1528 = vrcp.pop %v1512
        %v1529 = vrcp.pop %v1513
        %v1530 = vrcp.pop %v1514
        %v1531 = vrcp.pop %v1515
        %v1532 = vrcp.pop %v1516
        %v1533 = vrcp.pop %v1517
        %v1534 = vrcp.pop %v1518
        %v1535 = vrcp.pop %v1519
        %v1536 = vrcp.pop %v1520
        %v1537 = vrcp.pop %v1521
        %v1538 = vrcp.pop %v1522
        %v1539 = vrcp.pop %v1523
        %v1540 = vrcp.pop %v1524
        %v1541 = vrcp.pop %v1525
        %v1542 = vrcp.pop %v1526
        %v1543 = vrcp.pop %v1527
        %1545 = vset.pattern.permute.xlu0 0
        %1546 = vperm.xlu0 %1545, %v1528
        %v1547 = vpop.permute.xlu0 %1546
        %1550 = vset.pattern.permute.xlu0 0
        %1551 = vperm.xlu0 %1550, %v1529
        %v1552 = vpop.permute.xlu0 %1551
        %1555 = vset.pattern.permute.xlu0 0
        %1556 = vperm.xlu0 %1555, %v1530
        %v1557 = vpop.permute.xlu0 %1556
        %1560 = vset.pattern.permute.xlu0 0
        %1561 = vperm.xlu0 %1560, %v1531
        %v1562 = vpop.permute.xlu0 %1561
        %1565 = vset.pattern.permute.xlu0 0
        %1566 = vperm.xlu0 %1565, %v1532
        %v1567 = vpop.permute.xlu0 %1566
        %1570 = vset.pattern.permute.xlu0 0
        %1571 = vperm.xlu0 %1570, %v1533
        %v1572 = vpop.permute.xlu0 %1571
        %1575 = vset.pattern.permute.xlu0 0
        %1576 = vperm.xlu0 %1575, %v1534
        %v1577 = vpop.permute.xlu0 %1576
        %1580 = vset.pattern.permute.xlu0 0
        %1581 = vperm.xlu0 %1580, %v1535
        %v1582 = vpop.permute.xlu0 %1581
        %1585 = vset.pattern.permute.xlu0 0
        %1586 = vperm.xlu0 %1585, %v1536
        %v1587 = vpop.permute.xlu0 %1586
        %1590 = vset.pattern.permute.xlu0 0
        %1591 = vperm.xlu0 %1590, %v1537
        %v1592 = vpop.permute.xlu0 %1591
        %1595 = vset.pattern.permute.xlu0 0
        %1596 = vperm.xlu0 %1595, %v1538
        %v1597 = vpop.permute.xlu0 %1596
        %1600 = vset.pattern.permute.xlu0 0
        %1601 = vperm.xlu0 %1600, %v1539
        %v1602 = vpop.permute.xlu0 %1601
        %1605 = vset.pattern.permute.xlu0 0
        %1606 = vperm.xlu0 %1605, %v1540
        %v1607 = vpop.permute.xlu0 %1606
        %1610 = vset.pattern.permute.xlu0 0
        %1611 = vperm.xlu0 %1610, %v1541
        %v1612 = vpop.permute.xlu0 %1611
        %1615 = vset.pattern.permute.xlu0 0
        %1616 = vperm.xlu0 %1615, %v1542
        %v1617 = vpop.permute.xlu0 %1616
        %1620 = vset.pattern.permute.xlu0 0
        %1621 = vperm.xlu0 %1620, %v1543
        %v1622 = vpop.permute.xlu0 %1621
        %v1624 = vmul.f32 %v1496, %v1547
        %v1625 = vmul.f32 %v1497, %v1552
        %v1626 = vmul.f32 %v1498, %v1557
        %v1627 = vmul.f32 %v1499, %v1562
        %v1628 = vmul.f32 %v1500, %v1567
        %v1629 = vmul.f32 %v1501, %v1572
        %v1630 = vmul.f32 %v1502, %v1577
        %v1631 = vmul.f32 %v1503, %v1582
        %v1632 = vmul.f32 %v1504, %v1587
        %v1633 = vmul.f32 %v1505, %v1592
        %v1634 = vmul.f32 %v1506, %v1597
        %v1635 = vmul.f32 %v1507, %v1602
        %v1636 = vmul.f32 %v1508, %v1607
        %v1637 = vmul.f32 %v1509, %v1612
        %v1638 = vmul.f32 %v1510, %v1617
        %v1639 = vmul.f32 %v1511, %v1622
        %1640 = vst.msk [vmem:[%s347] sm:$0xff] %vm437, %v1624
        %1641 = vst.msk [vmem:[%s347 + $0x8] sm:$0xff] %vm437, %v1625
        %1642 = vst.msk [vmem:[%s347 + $0x10] sm:$0xff] %vm437, %v1626
        %1643 = vst.msk [vmem:[%s347 + $0x18] sm:$0xff] %vm437, %v1627
        %1644 = vst.msk [vmem:[%s347 + $0x20] sm:$0xff] %vm437, %v1628
        %1645 = vst.msk [vmem:[%s347 + $0x28] sm:$0xff] %vm437, %v1629
        %1646 = vst.msk [vmem:[%s347 + $0x30] sm:$0xff] %vm437, %v1630
        %1647 = vst.msk [vmem:[%s347 + $0x38] sm:$0xff] %vm437, %v1631
        %1648 = vst.msk [vmem:[%s347 + $0x40] sm:$0xff] %vm437, %v1632
        %1649 = vst.msk [vmem:[%s347 + $0x48] sm:$0xff] %vm437, %v1633
        %1650 = vst.msk [vmem:[%s347 + $0x50] sm:$0xff] %vm437, %v1634
        %1651 = vst.msk [vmem:[%s347 + $0x58] sm:$0xff] %vm437, %v1635
        %1652 = vst.msk [vmem:[%s347 + $0x60] sm:$0xff] %vm437, %v1636
        %1653 = vst.msk [vmem:[%s347 + $0x68] sm:$0xff] %vm437, %v1637
        %1654 = vst.msk [vmem:[%s347 + $0x70] sm:$0xff] %vm437, %v1638
        %1655 = vst.msk [vmem:[%s347 + $0x78] sm:$0xff] %vm437, %v1639
      $region44: #{tpu_custom_call.1} parent=35 // pred_fallthru
        _
      %s1656 = smul.u32 16, %s21
      %p1657 = scmp.lt.s32.totalorder %s20, 1
      %s1658 = scalar_select %p1657, %s20, 1
      %p1659 = scmp.lt.s32.totalorder %s1656, 15
      %s1660 = scalar_select %p1659, %s1656, 15
      %s1661 = smul.addr %s1658, 16
      %s1662 = sadd.s32 %s1660, %s1661
      %s1663 = smul.addr %s1662, 8
      %s1664 = scalar_lea.vmem %s4, %s1663
      // Predicated region
      $region45: #{tpu_custom_call.1} parent=35 // pred_check
        %p1665 = pneg %p166
      $region46: #{tpu_custom_call.1} parent=35 // pred_check_branch
        %1667 = sbr.rel (%p1665) target = $region48
      $region47: #{tpu_custom_call.1} parent=35 // pred_region
        %s1668 = smul.u32 16, %s21
      $region48: #{tpu_custom_call.1} parent=35 // pred_fallthru
        _
    $region36: #{tpu_custom_call.1} parent=5 // pred_fallthru
      _
    %p1669 = scmp.le.s32.totalorder 2, %s10
    // Predicated region
    $region49: #{tpu_custom_call.1} parent=5 // pred_check
      %p1670 = pneg %p1669
    $region50: #{tpu_custom_call.1} parent=5 // pred_check_branch
      %1672 = sbr.rel (%p1670) target = $region52
    $region51: #{tpu_custom_call.1} parent=5 // pred_region
      %s1673 = ssub.s32 %s10, 2
      // Predicated region
      $region53: #{tpu_custom_call.1} parent=51 // pred_check
        %p1674 = pneg %p172
      $region54: #{tpu_custom_call.1} parent=51 // pred_check_branch
        %1676 = sbr.rel (%p1674) target = $region56
      $region55: #{tpu_custom_call.1} parent=51 // pred_region
        %s1677 = smul.u32 16, %s24
        %p1678 = scmp.lt.s32.totalorder %s23, 1
        %s1679 = scalar_select %p1678, %s23, 1
        %p1680 = scmp.lt.s32.totalorder %s1677, 15
        %s1681 = scalar_select %p1680, %s1677, 15
        %s1682 = smul.addr %s1679, 16
        %s1683 = sadd.s32 %s1681, %s1682
        %s1684 = smul.addr %s1683, 8
        %s1685 = scalar_lea.vmem %s4, %s1684
      $region56: #{tpu_custom_call.1} parent=51 // pred_fallthru
        _
    $region52: #{tpu_custom_call.1} parent=5 // pred_fallthru
      _
  $region6: #{tpu_custom_call.1} parent=0 // loop_footer
    %s14 = sadd.s32 1, %s10
  $region7: #{tpu_custom_call.1} parent=0 // loop_footer_branch
    %9 = sbr.rel target = $region3
  $region8: #{tpu_custom_call.1} parent=0 // loop_exit
    _

</llo_original>
